<compile_context>
chip_gen: v5e
topology: v5e:2x2
jax: 0.10.0
libtpu: 0.0.40
codegen_flags: <defaults>
</compile_context>

<pallas_src>
import functools

import jax
import jax.numpy as jnp
from jax import lax
from jax.experimental import pallas as pl
from jax.experimental.pallas import tpu as pltpu

EPS = 1e-5

# Scoped VMEM budget: 32 MiB is safe on every generation (v7x has only 64 MiB
# physical VMEM per TensorCore); the tile pickers size blocks well under it.
VMEM_LIMIT_BYTES = 32 * 1024 * 1024

# Storage dtype for the intermediate y = conv1(relu(bn1(x))) between kernels.
# Both kernels are HBM-bound at these channel ratios and the y round trip is
# ~2/3 of the traffic, so bf16 storage is a ~30% byte cut.  BN2 statistics are
# computed from the f32 value *before* the downcast and all BN/ReLU arithmetic
# stays in f32 (v5e has no bf16 VPU).
Y_DTYPE = jnp.bfloat16

# MXU operand dtype.  f32 keeps bit-level parity with the PyTorch reference;
# at DenseNet-scale channel counts switch to jnp.bfloat16 on v6e/v7x (the
# K=9*Cint matmul becomes the MXU term that matters and f32 operands cost
# extra passes).  On v5e this choice is irrelevant (deeply memory-bound).
MXU_DTYPE = jnp.float32


# --------------------------- Pallas kernels ---------------------------------

def _bn_relu_conv1x1_kernel(x_ref, scale_ref, shift_ref, w_ref, y_ref, stats_ref):
    """One (batch, HW-tile) step:  y = w1 @ relu(bn1(x));  accumulate BN2 stats.

    x:(Cin,THW) scale/shift:(Cin,1) w:(Cint,Cin) -> y:(Cint,THW) in Y_DTYPE.
    stats:(Cint,2) is a revisited output block (same block for every HW tile of
    a batch element) holding [sum, sum_of_squares] of the f32 y, accumulated
    across the 'arbitrary' HW grid axis so BN2 needs no extra pass over y.
    """
    j = pl.program_id(1)

    a = jnp.maximum(x_ref[...] * scale_ref[...] + shift_ref[...], 0.0)      # (Cin, THW) f32
    y = jnp.dot(w_ref[...].astype(MXU_DTYPE), a.astype(MXU_DTYPE),
                preferred_element_type=jnp.float32)                         # (Cint, THW) f32
    y_ref[...] = y.astype(y_ref.dtype)

    @pl.when(j == 0)
    def _():
        stats_ref[...] = jnp.zeros_like(stats_ref)

    s = jnp.sum(y, axis=-1, keepdims=True)                                  # (Cint, 1)
    ss = jnp.sum(y * y, axis=-1, keepdims=True)                             # (Cint, 1)
    stats_ref[...] += jnp.concatenate([s, ss], axis=-1)                     # (Cint, 2)


def _bn_relu_conv3x3_concat_kernel(x_ref, y_ref, ht_ref, hb_ref, scale_ref,
                                   shift_ref, w_ref, o_ref, patches_ref, *, W, R):
    """One (batch, row-group) step:  o = [x ; conv3x3(relu(bn2(y)), pad=1)].

    x:(Cin,R*W)  y:(Cint,R*W)  ht/hb:(Cint,W) halo rows  scale/shift:(Cint,1)
    w:(Cout,9*Cint)  o:(Cin+Cout,R*W)  patches (VMEM scratch):(9*Cint,R*W).
    """
    Cin = x_ref.shape[0]
    Cint, RW = y_ref.shape
    j = pl.program_id(1)
    n_row = pl.num_programs(1)

    # Padded slab of R+4 rows on the lane axis:
    #   [zero pad | top halo | R rows | bottom halo | zero pad]
    # The two pad rows are only ever read by column-masked taps.
    zrow = jnp.zeros((Cint, W), y_ref.dtype)
    slab = jnp.concatenate([zrow, ht_ref[...], y_ref[...], hb_ref[...], zrow],
                           axis=1).astype(jnp.float32)                      # (Cint, (R+4)*W)

    # BN2 (folded scale/shift) + ReLU in f32 on the VPU.
    a = jnp.maximum(slab * scale_ref[...] + shift_ref[...], 0.0)

    # Conv zero-padding at the image top/bottom: the halo row must contribute
    # exactly 0 there (not relu(shift2)).  Interior tiles keep real halo rows.
    lane = lax.broadcasted_iota(jnp.int32, (1, a.shape[1]), 1)
    keep = jnp.logical_and(
        jnp.logical_or(j > 0, lane >= 2 * W),
        jnp.logical_or(j < n_row - 1, lane < (R + 2) * W))
    a = a * keep.astype(jnp.float32)

    # Column-border masks generated in-kernel (no HBM mask tensor).
    col = lax.broadcasted_iota(jnp.int32, (1, RW), 1) % W
    mask_l = (col > 0).astype(jnp.float32)          # for dw = -1 taps
    mask_r = (col < W - 1).astype(jnp.float32)      # for dw = +1 taps

    # im2col: 9 shifted windows of the slab.  Each tap is stored straight into
    # VMEM scratch so only one (Cint, RW) temporary is live at a time.
    # (Cint = 4*out_planes: sublane-aligned slices whenever Cint % 8 == 0.)
    t = 0
    for dh in (-1, 0, 1):
        for dw in (-1, 0, 1):
            base = (2 + dh) * W + dw
            tap = a[:, base:base + RW]
            if dw == -1:
                tap = tap * mask_l
            elif dw == 1:
                tap = tap * mask_r
            patches_ref[t * Cint:(t + 1) * Cint, :] = tap
            t += 1

    # Single MXU matmul with K = 9*Cint (never split into 9 small-K matmuls).
    conv = jnp.dot(w_ref[...].astype(MXU_DTYPE), patches_ref[...].astype(MXU_DTYPE),
                   preferred_element_type=jnp.float32)                      # (Cout, RW)

    # Emit the concatenated block with ONE full-tile, lane-dense store.
    o_ref[...] = jnp.concatenate([x_ref[...].astype(jnp.float32), conv],
                                 axis=0).astype(o_ref.dtype)


# --------------------------- tile selection ----------------------------------

def _pick_hw_tile(hw, c_in, c_int, y_bytes, budget=8 << 20):
    """Largest lane tile (multiple of 128 dividing hw) whose double-buffered
    kernel-1 blocks + temporaries fit `budget`; prefers >=2 tiles per batch
    element so the BlockSpec pipeline has depth even at batch size 1."""
    def fits(t):
        return t * (3 * c_in * 4 + c_int * (2 * y_bytes + 8)) <= budget
    cands = [t for t in (32768, 16384, 8192, 4096, 2048, 1024, 512, 256, 128)
             if hw % t == 0 and fits(t)]
    multi = [t for t in cands if hw // t >= 2]
    if multi:
        return multi[0]
    if cands:
        return cands[0]
    return hw   # TODO(synk): masked-tail path when hw has no 128-multiple divisor.


def _pick_row_tile(H, W, c_in, c_int, c_out, y_bytes, budget=16 << 20):
    """Largest row group R (divisor of H, lane-dense R*W) whose kernel-2 working
    set (double-buffered blocks + im2col scratch + slab temporaries) fits
    `budget`; prefers >=2 row groups so both megacore TCs get work per image."""
    def fits(R):
        rw = R * W
        io = 2 * rw * (c_in * 4 + c_int * y_bytes + (c_in + c_out) * 4)
        patches = 9 * c_int * rw * 4
        live = 4 * c_int * (R + 4) * W * 4
        return io + patches + live <= budget
    cands = [R for R in range(H, 0, -1)
             if H % R == 0 and ((R * W) % 128 == 0 or R == H) and fits(R)]
    multi = [R for R in cands if H // R >= 2]
    if multi:
        return multi[0]
    if cands:
        return cands[0]
    return H    # TODO(synk): sub-row tiling for pathological (huge-W) shapes.


# --------------------------- wrapper ------------------------------------------

def bottleneck_block_forward(x_nchw, params):
    gamma1, beta1, w1_oihw, gamma2, beta2, w2_oihw = params
    N, Cin, H, W = x_nchw.shape
    Cint = w1_oihw.shape[0]           # inter_planes = out_planes * 4
    Cout = w2_oihw.shape[0]
    HW = H * W
    y_bytes = jnp.dtype(Y_DTYPE).itemsize

    x3 = x_nchw.reshape(N, Cin, HW)   # NCHW kept end-to-end; reshape is free.

    # ---- BN1: training-mode (biased) batch stats in ONE fused pass over x ----
    cnt = jnp.float32(N * HW)
    s1 = jnp.sum(x3, axis=(0, 2))
    ss1 = jnp.sum(x3 * x3, axis=(0, 2))
    mean1 = s1 / cnt
    var1 = ss1 / cnt - mean1 * mean1
    inv1 = gamma1 / jnp.sqrt(var1 + EPS)
    scale1 = inv1.reshape(Cin, 1)
    shift1 = (beta1 - mean1 * inv1).reshape(Cin, 1)

    w1_mat = w1_oihw[:, :, 0, 0]      # (Cint, Cin)

    THW = _pick_hw_tile(HW, Cin, Cint, y_bytes)
    n_hw = HW // THW

    # ---- kernel 1: bn1 + relu + 1x1 conv, fused BN2 partial statistics ----
    y3, stats = pl.pallas_call(
        _bn_relu_conv1x1_kernel,
        grid=(N, n_hw),
        out_shape=(jax.ShapeDtypeStruct((N, Cint, HW), Y_DTYPE),
                   jax.ShapeDtypeStruct((N, Cint, 2), jnp.float32)),
        in_specs=[
            pl.BlockSpec((None, Cin, THW), lambda i, j: (i, 0, j)),
            pl.BlockSpec((Cin, 1), lambda i, j: (0, 0)),
            pl.BlockSpec((Cin, 1), lambda i, j: (0, 0)),
            pl.BlockSpec((Cint, Cin), lambda i, j: (0, 0)),
        ],
        out_specs=(
            pl.BlockSpec((None, Cint, THW), lambda i, j: (i, 0, j)),
            pl.BlockSpec((None, Cint, 2), lambda i, j: (i, 0, 0)),
        ),
        compiler_params=pltpu.CompilerParams(
            dimension_semantics=("parallel", "arbitrary"),
            vmem_limit_bytes=VMEM_LIMIT_BYTES),
    )(x3, scale1, shift1, w1_mat)

    # ---- BN2 statistics finalized from the fused per-batch partial sums ----
    tot = jnp.sum(stats, axis=0)                  # (Cint, 2)
    mean2 = tot[:, 0] / cnt
    var2 = tot[:, 1] / cnt - mean2 * mean2        # biased, like PyTorch BN in train mode
    inv2 = gamma2 / jnp.sqrt(var2 + EPS)
    scale2 = inv2.reshape(Cint, 1)
    shift2 = (beta2 - mean2 * inv2).reshape(Cint, 1)

    # 3x3 weights flattened for the single K = 9*Cint im2col matmul:
    # w2_flat[co, (kh*3+kw)*Cint + ci] = w2[co, ci, kh, kw]
    w2_flat = jnp.transpose(w2_oihw, (0, 2, 3, 1)).reshape(Cout, 9 * Cint)

    # ---- row tiling for kernel 2: R rows per step with a 1-row halo ----
    R = _pick_row_tile(H, W, Cin, Cint, Cout, y_bytes)
    n_row = H // R

    y_rows = y3.reshape(N, Cint, H, W)
    zrow = jnp.zeros((N, 1, Cint, W), y3.dtype)
    if n_row > 1:
        # halo_top[n, j] = y[n, :, j*R - 1, :]   (zeros for j == 0)
        ht = jnp.swapaxes(y_rows[:, :, R - 1:H - 1:R, :], 1, 2)
        # halo_bot[n, j] = y[n, :, (j+1)*R, :]   (zeros for j == n_row-1)
        hb = jnp.swapaxes(y_rows[:, :, R:H:R, :], 1, 2)
        halo_top = jnp.concatenate([zrow, ht], axis=1)    # (N, n_row, Cint, W)
        halo_bot = jnp.concatenate([hb, zrow], axis=1)    # (N, n_row, Cint, W)
    else:
        halo_top = zrow
        halo_bot = zrow

    # ---- kernel 2: bn2 + relu + 3x3 conv (pad=1) fused with the channel concat ----
    out3 = pl.pallas_call(
        functools.partial(_bn_relu_conv3x3_concat_kernel, W=W, R=R),
        grid=(N, n_row),
        out_shape=jax.ShapeDtypeStruct((N, Cin + Cout, HW), x_nchw.dtype),
        in_specs=[
            pl.BlockSpec((None, Cin, R * W), lambda n, j: (n, 0, j)),
            pl.BlockSpec((None, Cint, R * W), lambda n, j: (n, 0, j)),
            pl.BlockSpec((None, None, Cint, W), lambda n, j: (n, j, 0, 0)),
            pl.BlockSpec((None, None, Cint, W), lambda n, j: (n, j, 0, 0)),
            pl.BlockSpec((Cint, 1), lambda n, j: (0, 0)),
            pl.BlockSpec((Cint, 1), lambda n, j: (0, 0)),
            pl.BlockSpec((Cout, 9 * Cint), lambda n, j: (0, 0)),
        ],
        out_specs=pl.BlockSpec((None, Cin + Cout, R * W), lambda n, j: (n, 0, j)),
        scratch_shapes=[pltpu.VMEM((9 * Cint, R * W), jnp.float32)],
        compiler_params=pltpu.CompilerParams(
            dimension_semantics=("parallel", "parallel"),
            vmem_limit_bytes=VMEM_LIMIT_BYTES),
    )(x3, y3, halo_top, halo_bot, scale2, shift2, w2_flat)

    return out3.reshape(N, Cin + Cout, H, W)


# --------------------------- pure-JAX reference -------------------------------

def reference_forward(x, params, y_round_dtype=None):
    """PyTorch-semantics reference.  If y_round_dtype is given, the intermediate
    activation is rounded through that dtype (matching the kernel's bf16 HBM
    round trip); BN2 statistics are always taken from the full-precision y,
    exactly like the Pallas path."""
    gamma1, beta1, w1, gamma2, beta2, w2 = params

    def bn_stats(t):
        return (t.mean(axis=(0, 2, 3), keepdims=True),
                t.var(axis=(0, 2, 3), keepdims=True))

    m1, v1 = bn_stats(x)
    a1 = jnp.maximum((x - m1) / jnp.sqrt(v1 + EPS) * gamma1.reshape(1, -1, 1, 1)
                     + beta1.reshape(1, -1, 1, 1), 0.0)
    y = lax.conv_general_dilated(a1, w1, (1, 1), "VALID",
                                 dimension_numbers=("NCHW", "OIHW", "NCHW"))
    m2, v2 = bn_stats(y)
    if y_round_dtype is not None:
        y = y.astype(y_round_dtype).astype(jnp.float32)
    a2 = jnp.maximum((y - m2) / jnp.sqrt(v2 + EPS) * gamma2.reshape(1, -1, 1, 1)
                     + beta2.reshape(1, -1, 1, 1), 0.0)
    out = lax.conv_general_dilated(a2, w2, (1, 1), ((1, 1), (1, 1)),
                                   dimension_numbers=("NCHW", "OIHW", "NCHW"))
    return jnp.concatenate([x, out], axis=1)


# --------------------------- main ---------------------------------------------

if __name__ == "__main__":
    N, in_planes, out_planes, H, W = 2, 4, 4, 16, 16
    inter_planes = out_planes * 4

    key = jax.random.PRNGKey(0)
    kx, kg1, kb1, kw1, kg2, kb2, kw2 = jax.random.split(key, 7)

    x = jax.random.normal(kx, (N, in_planes, H, W), jnp.float32)

    gamma1 = 1.0 + 0.1 * jax.random.normal(kg1, (in_planes,), jnp.float32)
    beta1 = 0.1 * jax.random.normal(kb1, (in_planes,), jnp.float32)
    w1 = 0.1 * jax.random.normal(kw1, (inter_planes, in_planes, 1, 1), jnp.float32)
    gamma2 = 1.0 + 0.1 * jax.random.normal(kg2, (inter_planes,), jnp.float32)
    beta2 = 0.1 * jax.random.normal(kb2, (inter_planes,), jnp.float32)
    w2 = 0.1 * jax.random.normal(kw2, (out_planes, inter_planes, 3, 3), jnp.float32)

    params = (gamma1, beta1, w1, gamma2, beta2, w2)

    fwd = jax.jit(bottleneck_block_forward)
    out = jax.block_until_ready(fwd(x, params))
    assert out.shape == (N, in_planes + out_planes, H, W), out.shape

    is_f32_y = jnp.dtype(Y_DTYPE) == jnp.dtype(jnp.float32)

    # Matched-precision reference (same Y_DTYPE rounding of the intermediate):
    # tight check of the kernel math itself.
    ref_m = jax.block_until_ready(reference_forward(x, params, y_round_dtype=Y_DTYPE))
    tol_m = 1e-4 if is_f32_y else 1e-2
    assert jnp.allclose(out, ref_m, rtol=tol_m, atol=tol_m), \
        float(jnp.max(jnp.abs(out - ref_m)))

    # Full-f32 PyTorch-semantics reference: loose when y is stored in bf16.
    ref = jax.block_until_ready(reference_forward(x, params))
    tol = 1e-4 if is_f32_y else 5e-2
    assert jnp.allclose(out, ref, rtol=tol, atol=tol), \
        float(jnp.max(jnp.abs(out - ref)))

    print("KERNEL_OK")
</pallas_src>

<mosaic_0001>
module attributes {stable_mosaic.version = 11 : i64} {
  func.func @_bn_relu_conv1x1_kernel(%arg0: i32, %arg1: i32, %arg2: memref<1x4x128xf32, #tpu.memory_space<vmem>>, %arg3: memref<4x1xf32, #tpu.memory_space<vmem>>, %arg4: memref<4x1xf32, #tpu.memory_space<vmem>>, %arg5: memref<16x4xf32, #tpu.memory_space<vmem>>, %arg6: memref<1x16x128xbf16, #tpu.memory_space<vmem>>, %arg7: memref<1x16x2xf32, #tpu.memory_space<vmem>>) attributes {dimension_semantics = [#tpu.dimension_semantics<parallel>, #tpu.dimension_semantics<arbitrary>], iteration_bounds = array<i64: 2, 2>, scalar_prefetch = 0 : i64, scratch_operands = 0 : i64, tpu.core_type = #tpu.core_type<tc>, window_params = [{transform_indices = @transform_0, window_bounds = array<i64: 1, 4, 128>}, {pipeline_mode = #tpu.pipeline_mode<synchronous>, transform_indices = @transform_1, window_bounds = array<i64: 4, 1>}, {pipeline_mode = #tpu.pipeline_mode<synchronous>, transform_indices = @transform_2, window_bounds = array<i64: 4, 1>}, {pipeline_mode = #tpu.pipeline_mode<synchronous>, transform_indices = @transform_3, window_bounds = array<i64: 16, 4>}, {transform_indices = @transform_4, window_bounds = array<i64: 1, 16, 128>}, {transform_indices = @transform_5, window_bounds = array<i64: 1, 16, 2>}]} {
    %c0 = arith.constant 0 : index
    %c0_0 = arith.constant 0 : index
    %c0_1 = arith.constant 0 : index
    %0 = vector.load %arg2[%c0, %c0_0, %c0_1] : memref<1x4x128xf32, #tpu.memory_space<vmem>>, vector<1x4x128xf32>
    %1 = vector.shape_cast %0 : vector<1x4x128xf32> to vector<4x128xf32>
    %c0_2 = arith.constant 0 : index
    %c0_3 = arith.constant 0 : index
    %2 = vector.load %arg3[%c0_2, %c0_3] : memref<4x1xf32, #tpu.memory_space<vmem>>, vector<4x1xf32>
    %3 = vector.broadcast %2 : vector<4x1xf32> to vector<4x128xf32>
    %4 = arith.mulf %1, %3 : vector<4x128xf32>
    %c0_4 = arith.constant 0 : index
    %c0_5 = arith.constant 0 : index
    %5 = vector.load %arg4[%c0_4, %c0_5] : memref<4x1xf32, #tpu.memory_space<vmem>>, vector<4x1xf32>
    %6 = vector.broadcast %5 : vector<4x1xf32> to vector<4x128xf32>
    %7 = arith.addf %4, %6 : vector<4x128xf32>
    %cst = arith.constant 0.000000e+00 : f32
    %8 = vector.broadcast %cst : f32 to vector<4x128xf32>
    %9 = arith.maximumf %7, %8 : vector<4x128xf32>
    %c0_6 = arith.constant 0 : index
    %c0_7 = arith.constant 0 : index
    %10 = vector.load %arg5[%c0_6, %c0_7] : memref<16x4xf32, #tpu.memory_space<vmem>>, vector<16x4xf32>
    %cst_8 = arith.constant dense<0.000000e+00> : vector<16x128xf32>
    %11 = tpu.matmul %10, %9, %cst_8 {dimension_numbers = #tpu.dot_dimension_numbers<[1], [0], [0], [1], [0, 0, 1, 1], [], []>} : vector<16x4xf32>, vector<4x128xf32>, vector<16x128xf32> -> vector<16x128xf32>
    %12 = arith.truncf %11 : vector<16x128xf32> to vector<16x128xbf16>
    %c0_9 = arith.constant 0 : index
    %c0_10 = arith.constant 0 : index
    %c0_11 = arith.constant 0 : index
    %13 = vector.load %arg6[%c0_9, %c0_10, %c0_11] : memref<1x16x128xbf16, #tpu.memory_space<vmem>>, vector<1x16x128xbf16>
    %14 = vector.shape_cast %13 : vector<1x16x128xbf16> to vector<16x128xbf16>
    %15 = vector.shape_cast %12 : vector<16x128xbf16> to vector<1x16x128xbf16>
    tpu.vector_store %arg6[%c0_9, %c0_10, %c0_11], %15 {strides = array<i32>} : memref<1x16x128xbf16, #tpu.memory_space<vmem>>, vector<1x16x128xbf16>,
    %c0_i32 = arith.constant 0 : i32
    %16 = arith.cmpi eq, %arg1, %c0_i32 : i32
    %17 = arith.extui %16 : i1 to i32
    %c0_i32_12 = arith.constant 0 : i32
    %18 = arith.cmpi ne, %17, %c0_i32_12 : i32
    scf.if %18 {
      %cst_21 = arith.constant 0.000000e+00 : f32
      %31 = vector.broadcast %cst_21 : f32 to vector<16x2xf32>
      %c0_22 = arith.constant 0 : index
      %c0_23 = arith.constant 0 : index
      %c0_24 = arith.constant 0 : index
      %32 = vector.load %arg7[%c0_22, %c0_23, %c0_24] : memref<1x16x2xf32, #tpu.memory_space<vmem>>, vector<1x16x2xf32>
      %33 = vector.shape_cast %32 : vector<1x16x2xf32> to vector<16x2xf32>
      %34 = vector.shape_cast %31 : vector<16x2xf32> to vector<1x16x2xf32>
      tpu.vector_store %arg7[%c0_22, %c0_23, %c0_24], %34 {strides = array<i32>} : memref<1x16x2xf32, #tpu.memory_space<vmem>>, vector<1x16x2xf32>,
    } else {
    }
    %cst_13 = arith.constant dense<0.000000e+00> : vector<16xf32>
    %19 = vector.multi_reduction <add>, %11, %cst_13 [1] : vector<16x128xf32> to vector<16xf32>
    %20 = vector.shape_cast %19 : vector<16xf32> to vector<16x1xf32>
    %21 = arith.mulf %11, %11 : vector<16x128xf32>
    %cst_14 = arith.constant dense<0.000000e+00> : vector<16xf32>
    %22 = vector.multi_reduction <add>, %21, %cst_14 [1] : vector<16x128xf32> to vector<16xf32>
    %23 = vector.shape_cast %22 : vector<16xf32> to vector<16x1xf32>
    %c0_15 = arith.constant 0 : index
    %c0_16 = arith.constant 0 : index
    %c0_17 = arith.constant 0 : index
    %24 = vector.load %arg7[%c0_15, %c0_16, %c0_17] : memref<1x16x2xf32, #tpu.memory_space<vmem>>, vector<1x16x2xf32>
    %25 = vector.shape_cast %24 : vector<1x16x2xf32> to vector<16x2xf32>
    %26 = tpu.concatenate %20, %23 in 1 : vector<16x1xf32>, vector<16x1xf32> -> vector<16x2xf32>
    %27 = arith.addf %25, %26 : vector<16x2xf32>
    %c0_18 = arith.constant 0 : index
    %c0_19 = arith.constant 0 : index
    %c0_20 = arith.constant 0 : index
    %28 = vector.load %arg7[%c0_18, %c0_19, %c0_20] : memref<1x16x2xf32, #tpu.memory_space<vmem>>, vector<1x16x2xf32>
    %29 = vector.shape_cast %28 : vector<1x16x2xf32> to vector<16x2xf32>
    %30 = vector.shape_cast %27 : vector<16x2xf32> to vector<1x16x2xf32>
    tpu.vector_store %arg7[%c0_18, %c0_19, %c0_20], %30 {strides = array<i32>} : memref<1x16x2xf32, #tpu.memory_space<vmem>>, vector<1x16x2xf32>,
    return
  }
  func.func @transform_0(%arg0: i32, %arg1: i32) -> (i32, i32, i32) {
    %c0_i32 = arith.constant 0 : i32
    %c0_i32_0 = arith.constant 0 : i32
    return %arg0, %c0_i32, %arg1 : i32, i32, i32
  }
  func.func @transform_1(%arg0: i32, %arg1: i32) -> (i32, i32) {
    %c0_i32 = arith.constant 0 : i32
    %c0_i32_0 = arith.constant 0 : i32
    %c0_i32_1 = arith.constant 0 : i32
    return %c0_i32, %c0_i32_0 : i32, i32
  }
  func.func @transform_2(%arg0: i32, %arg1: i32) -> (i32, i32) {
    %c0_i32 = arith.constant 0 : i32
    %c0_i32_0 = arith.constant 0 : i32
    %c0_i32_1 = arith.constant 0 : i32
    return %c0_i32, %c0_i32_0 : i32, i32
  }
  func.func @transform_3(%arg0: i32, %arg1: i32) -> (i32, i32) {
    %c0_i32 = arith.constant 0 : i32
    %c0_i32_0 = arith.constant 0 : i32
    %c0_i32_1 = arith.constant 0 : i32
    return %c0_i32, %c0_i32_0 : i32, i32
  }
  func.func @transform_4(%arg0: i32, %arg1: i32) -> (i32, i32, i32) {
    %c0_i32 = arith.constant 0 : i32
    %c0_i32_0 = arith.constant 0 : i32
    return %arg0, %c0_i32, %arg1 : i32, i32, i32
  }
  func.func @transform_5(%arg0: i32, %arg1: i32) -> (i32, i32, i32) {
    %c0_i32 = arith.constant 0 : i32
    %c0_i32_0 = arith.constant 0 : i32
    %c0_i32_1 = arith.constant 0 : i32
    return %arg0, %c0_i32, %c0_i32_0 : i32, i32, i32
  }
}

module attributes {stable_mosaic.version = 11 : i64} {
  func.func @_bn_relu_conv3x3_concat_kernel(%arg0: i32, %arg1: i32, %arg2: memref<1x4x128xf32, #tpu.memory_space<vmem>>, %arg3: memref<1x16x128xbf16, #tpu.memory_space<vmem>>, %arg4: memref<1x1x16x16xbf16, #tpu.memory_space<vmem>>, %arg5: memref<1x1x16x16xbf16, #tpu.memory_space<vmem>>, %arg6: memref<16x1xf32, #tpu.memory_space<vmem>>, %arg7: memref<16x1xf32, #tpu.memory_space<vmem>>, %arg8: memref<4x144xf32, #tpu.memory_space<vmem>>, %arg9: memref<1x8x128xf32, #tpu.memory_space<vmem>>, %arg10: memref<144x128xf32, #tpu.memory_space<vmem>>) attributes {dimension_semantics = [#tpu.dimension_semantics<parallel>, #tpu.dimension_semantics<parallel>], iteration_bounds = array<i64: 2, 2>, scalar_prefetch = 0 : i64, scratch_operands = 1 : i64, tpu.core_type = #tpu.core_type<tc>, window_params = [{transform_indices = @transform_0, window_bounds = array<i64: 1, 4, 128>}, {transform_indices = @transform_1, window_bounds = array<i64: 1, 16, 128>}, {transform_indices = @transform_2, window_bounds = array<i64: 1, 1, 16, 16>}, {transform_indices = @transform_3, window_bounds = array<i64: 1, 1, 16, 16>}, {pipeline_mode = #tpu.pipeline_mode<synchronous>, transform_indices = @transform_4, window_bounds = array<i64: 16, 1>}, {pipeline_mode = #tpu.pipeline_mode<synchronous>, transform_indices = @transform_5, window_bounds = array<i64: 16, 1>}, {pipeline_mode = #tpu.pipeline_mode<synchronous>, transform_indices = @transform_6, window_bounds = array<i64: 4, 144>}, {transform_indices = @transform_7, window_bounds = array<i64: 1, 8, 128>}]} {
    %cst = arith.constant 0.000000e+00 : bf16
    %0 = vector.broadcast %cst : bf16 to vector<16x16xbf16>
    %c0 = arith.constant 0 : index
    %c0_0 = arith.constant 0 : index
    %c0_1 = arith.constant 0 : index
    %c0_2 = arith.constant 0 : index
    %1 = vector.load %arg4[%c0, %c0_0, %c0_1, %c0_2] : memref<1x1x16x16xbf16, #tpu.memory_space<vmem>>, vector<1x1x16x16xbf16>
    %2 = vector.shape_cast %1 : vector<1x1x16x16xbf16> to vector<16x16xbf16>
    %c0_3 = arith.constant 0 : index
    %c0_4 = arith.constant 0 : index
    %c0_5 = arith.constant 0 : index
    %3 = vector.load %arg3[%c0_3, %c0_4, %c0_5] : memref<1x16x128xbf16, #tpu.memory_space<vmem>>, vector<1x16x128xbf16>
    %4 = vector.shape_cast %3 : vector<1x16x128xbf16> to vector<16x128xbf16>
    %c0_6 = arith.constant 0 : index
    %c0_7 = arith.constant 0 : index
    %c0_8 = arith.constant 0 : index
    %c0_9 = arith.constant 0 : index
    %5 = vector.load %arg5[%c0_6, %c0_7, %c0_8, %c0_9] : memref<1x1x16x16xbf16, #tpu.memory_space<vmem>>, vector<1x1x16x16xbf16>
    %6 = vector.shape_cast %5 : vector<1x1x16x16xbf16> to vector<16x16xbf16>
    %7 = tpu.concatenate %0, %2, %4, %6, %0 in 1 : vector<16x16xbf16>, vector<16x16xbf16>, vector<16x128xbf16>, vector<16x16xbf16>, vector<16x16xbf16> -> vector<16x192xbf16>
    %8 = arith.extf %7 : vector<16x192xbf16> to vector<16x192xf32>
    %c0_10 = arith.constant 0 : index
    %c0_11 = arith.constant 0 : index
    %9 = vector.load %arg6[%c0_10, %c0_11] : memref<16x1xf32, #tpu.memory_space<vmem>>, vector<16x1xf32>
    %10 = vector.broadcast %9 : vector<16x1xf32> to vector<16x192xf32>
    %11 = arith.mulf %8, %10 : vector<16x192xf32>
    %c0_12 = arith.constant 0 : index
    %c0_13 = arith.constant 0 : index
    %12 = vector.load %arg7[%c0_12, %c0_13] : memref<16x1xf32, #tpu.memory_space<vmem>>, vector<16x1xf32>
    %13 = vector.broadcast %12 : vector<16x1xf32> to vector<16x192xf32>
    %14 = arith.addf %11, %13 : vector<16x192xf32>
    %cst_14 = arith.constant 0.000000e+00 : f32
    %15 = vector.broadcast %cst_14 : f32 to vector<16x192xf32>
    %16 = arith.maximumf %14, %15 : vector<16x192xf32>
    %17 = tpu.iota {dimensions = array<i32: 1>} : vector<1x192xi32>
    %c0_i32 = arith.constant 0 : i32
    %18 = arith.cmpi sgt, %arg1, %c0_i32 : i32
    %c32_i32 = arith.constant 32 : i32
    %19 = vector.broadcast %c32_i32 : i32 to vector<1x192xi32>
    %20 = arith.cmpi sge, %17, %19 : vector<1x192xi32>
    %21 = vector.broadcast %18 : i1 to vector<1x192xi1>
    %22 = arith.ori %21, %20 : vector<1x192xi1>
    %c1_i32 = arith.constant 1 : i32
    %23 = arith.cmpi slt, %arg1, %c1_i32 : i32
    %c160_i32 = arith.constant 160 : i32
    %24 = vector.broadcast %c160_i32 : i32 to vector<1x192xi32>
    %25 = arith.cmpi slt, %17, %24 : vector<1x192xi32>
    %26 = vector.broadcast %23 : i1 to vector<1x192xi1>
    %27 = arith.ori %26, %25 : vector<1x192xi1>
    %28 = arith.andi %22, %27 : vector<1x192xi1>
    %29 = arith.extui %28 : vector<1x192xi1> to vector<1x192xi32>
    %30 = arith.sitofp %29 : vector<1x192xi32> to vector<1x192xf32>
    %31 = vector.broadcast %30 : vector<1x192xf32> to vector<16x192xf32>
    %32 = arith.mulf %16, %31 : vector<16x192xf32>
    %33 = tpu.iota {dimensions = array<i32: 1>} : vector<1x128xi32>
    %c16_i32 = arith.constant 16 : i32
    %c0_i32_15 = arith.constant 0 : i32
    %34 = arith.cmpi eq, %c16_i32, %c0_i32_15 : i32
    %c1_i32_16 = arith.constant 1 : i32
    %35 = arith.select %34, %c1_i32_16, %c16_i32 : i32
    %36 = vector.broadcast %35 : i32 to vector<1x128xi32>
    %37 = arith.remsi %33, %36 : vector<1x128xi32>
    %c0_i32_17 = arith.constant 0 : i32
    %38 = vector.broadcast %c0_i32_17 : i32 to vector<1x128xi32>
    %39 = arith.cmpi ne, %37, %38 : vector<1x128xi32>
    %c0_i32_18 = arith.constant 0 : i32
    %40 = vector.broadcast %c0_i32_18 : i32 to vector<1x128xi32>
    %41 = arith.cmpi slt, %37, %40 : vector<1x128xi32>
    %c0_i32_19 = arith.constant 0 : i32
    %42 = arith.cmpi slt, %35, %c0_i32_19 : i32
    %43 = vector.broadcast %42 : i1 to vector<1x128xi1>
    %44 = vector.broadcast %43 : vector<1x128xi1> to vector<1x128xi1>
    %45 = arith.xori %41, %44 : vector<1x128xi1>
    %46 = arith.andi %45, %39 : vector<1x128xi1>
    %47 = vector.broadcast %35 : i32 to vector<1x128xi32>
    %48 = arith.addi %37, %47 : vector<1x128xi32>
    %49 = arith.select %46, %48, %37 : vector<1x128xi1>, vector<1x128xi32>
    %c0_i32_20 = arith.constant 0 : i32
    %50 = vector.broadcast %c0_i32_20 : i32 to vector<1x128xi32>
    %51 = arith.cmpi sgt, %49, %50 : vector<1x128xi32>
    %52 = arith.extui %51 : vector<1x128xi1> to vector<1x128xi32>
    %53 = arith.sitofp %52 : vector<1x128xi32> to vector<1x128xf32>
    %c15_i32 = arith.constant 15 : i32
    %54 = vector.broadcast %c15_i32 : i32 to vector<1x128xi32>
    %55 = arith.cmpi slt, %49, %54 : vector<1x128xi32>
    %56 = arith.extui %55 : vector<1x128xi1> to vector<1x128xi32>
    %57 = arith.sitofp %56 : vector<1x128xi32> to vector<1x128xf32>
    %58 = vector.extract_strided_slice %32 {offsets = [0, 15], sizes = [16, 128], strides = [1, 1]} : vector<16x192xf32> to vector<16x128xf32>
    %59 = vector.broadcast %53 : vector<1x128xf32> to vector<16x128xf32>
    %60 = arith.mulf %58, %59 : vector<16x128xf32>
    %c0_21 = arith.constant 0 : index
    %c0_22 = arith.constant 0 : index
    %61 = vector.load %arg10[%c0_21, %c0_22] : memref<144x128xf32, #tpu.memory_space<vmem>>, vector<16x128xf32>
    tpu.vector_store %arg10[%c0_21, %c0_22], %60 {strides = array<i32>} : memref<144x128xf32, #tpu.memory_space<vmem>>, vector<16x128xf32>,
    %62 = vector.extract_strided_slice %32 {offsets = [0, 16], sizes = [16, 128], strides = [1, 1]} : vector<16x192xf32> to vector<16x128xf32>
    %c16 = arith.constant 16 : index
    %c0_23 = arith.constant 0 : index
    %63 = vector.load %arg10[%c16, %c0_23] : memref<144x128xf32, #tpu.memory_space<vmem>>, vector<16x128xf32>
    tpu.vector_store %arg10[%c16, %c0_23], %62 {strides = array<i32>} : memref<144x128xf32, #tpu.memory_space<vmem>>, vector<16x128xf32>,
    %64 = vector.extract_strided_slice %32 {offsets = [0, 17], sizes = [16, 128], strides = [1, 1]} : vector<16x192xf32> to vector<16x128xf32>
    %65 = vector.broadcast %57 : vector<1x128xf32> to vector<16x128xf32>
    %66 = arith.mulf %64, %65 : vector<16x128xf32>
    %c32 = arith.constant 32 : index
    %c0_24 = arith.constant 0 : index
    %67 = vector.load %arg10[%c32, %c0_24] : memref<144x128xf32, #tpu.memory_space<vmem>>, vector<16x128xf32>
    tpu.vector_store %arg10[%c32, %c0_24], %66 {strides = array<i32>} : memref<144x128xf32, #tpu.memory_space<vmem>>, vector<16x128xf32>,
    %68 = vector.extract_strided_slice %32 {offsets = [0, 31], sizes = [16, 128], strides = [1, 1]} : vector<16x192xf32> to vector<16x128xf32>
    %69 = vector.broadcast %53 : vector<1x128xf32> to vector<16x128xf32>
    %70 = arith.mulf %68, %69 : vector<16x128xf32>
    %c48 = arith.constant 48 : index
    %c0_25 = arith.constant 0 : index
    %71 = vector.load %arg10[%c48, %c0_25] : memref<144x128xf32, #tpu.memory_space<vmem>>, vector<16x128xf32>
    tpu.vector_store %arg10[%c48, %c0_25], %70 {strides = array<i32>} : memref<144x128xf32, #tpu.memory_space<vmem>>, vector<16x128xf32>,
    %72 = vector.extract_strided_slice %32 {offsets = [0, 32], sizes = [16, 128], strides = [1, 1]} : vector<16x192xf32> to vector<16x128xf32>
    %c64 = arith.constant 64 : index
    %c0_26 = arith.constant 0 : index
    %73 = vector.load %arg10[%c64, %c0_26] : memref<144x128xf32, #tpu.memory_space<vmem>>, vector<16x128xf32>
    tpu.vector_store %arg10[%c64, %c0_26], %72 {strides = array<i32>} : memref<144x128xf32, #tpu.memory_space<vmem>>, vector<16x128xf32>,
    %74 = vector.extract_strided_slice %32 {offsets = [0, 33], sizes = [16, 128], strides = [1, 1]} : vector<16x192xf32> to vector<16x128xf32>
    %75 = vector.broadcast %57 : vector<1x128xf32> to vector<16x128xf32>
    %76 = arith.mulf %74, %75 : vector<16x128xf32>
    %c80 = arith.constant 80 : index
    %c0_27 = arith.constant 0 : index
    %77 = vector.load %arg10[%c80, %c0_27] : memref<144x128xf32, #tpu.memory_space<vmem>>, vector<16x128xf32>
    tpu.vector_store %arg10[%c80, %c0_27], %76 {strides = array<i32>} : memref<144x128xf32, #tpu.memory_space<vmem>>, vector<16x128xf32>,
    %78 = vector.extract_strided_slice %32 {offsets = [0, 47], sizes = [16, 128], strides = [1, 1]} : vector<16x192xf32> to vector<16x128xf32>
    %79 = vector.broadcast %53 : vector<1x128xf32> to vector<16x128xf32>
    %80 = arith.mulf %78, %79 : vector<16x128xf32>
    %c96 = arith.constant 96 : index
    %c0_28 = arith.constant 0 : index
    %81 = vector.load %arg10[%c96, %c0_28] : memref<144x128xf32, #tpu.memory_space<vmem>>, vector<16x128xf32>
    tpu.vector_store %arg10[%c96, %c0_28], %80 {strides = array<i32>} : memref<144x128xf32, #tpu.memory_space<vmem>>, vector<16x128xf32>,
    %82 = vector.extract_strided_slice %32 {offsets = [0, 48], sizes = [16, 128], strides = [1, 1]} : vector<16x192xf32> to vector<16x128xf32>
    %c112 = arith.constant 112 : index
    %c0_29 = arith.constant 0 : index
    %83 = vector.load %arg10[%c112, %c0_29] : memref<144x128xf32, #tpu.memory_space<vmem>>, vector<16x128xf32>
    tpu.vector_store %arg10[%c112, %c0_29], %82 {strides = array<i32>} : memref<144x128xf32, #tpu.memory_space<vmem>>, vector<16x128xf32>,
    %84 = vector.extract_strided_slice %32 {offsets = [0, 49], sizes = [16, 128], strides = [1, 1]} : vector<16x192xf32> to vector<16x128xf32>
    %85 = vector.broadcast %57 : vector<1x128xf32> to vector<16x128xf32>
    %86 = arith.mulf %84, %85 : vector<16x128xf32>
    %c128 = arith.constant 128 : index
    %c0_30 = arith.constant 0 : index
    %87 = vector.load %arg10[%c128, %c0_30] : memref<144x128xf32, #tpu.memory_space<vmem>>, vector<16x128xf32>
    tpu.vector_store %arg10[%c128, %c0_30], %86 {strides = array<i32>} : memref<144x128xf32, #tpu.memory_space<vmem>>, vector<16x128xf32>,
    %c0_31 = arith.constant 0 : index
    %c0_32 = arith.constant 0 : index
    %88 = vector.load %arg8[%c0_31, %c0_32] : memref<4x144xf32, #tpu.memory_space<vmem>>, vector<4x144xf32>
    %c0_33 = arith.constant 0 : index
    %c0_34 = arith.constant 0 : index
    %89 = vector.load %arg10[%c0_33, %c0_34] : memref<144x128xf32, #tpu.memory_space<vmem>>, vector<144x128xf32>
    %cst_35 = arith.constant dense<0.000000e+00> : vector<4x128xf32>
    %90 = tpu.matmul %88, %89, %cst_35 {dimension_numbers = #tpu.dot_dimension_numbers<[1], [0], [0], [1], [0, 0, 1, 1], [], []>} : vector<4x144xf32>, vector<144x128xf32>, vector<4x128xf32> -> vector<4x128xf32>
    %c0_36 = arith.constant 0 : index
    %c0_37 = arith.constant 0 : index
    %c0_38 = arith.constant 0 : index
    %91 = vector.load %arg2[%c0_36, %c0_37, %c0_38] : memref<1x4x128xf32, #tpu.memory_space<vmem>>, vector<1x4x128xf32>
    %92 = vector.shape_cast %91 : vector<1x4x128xf32> to vector<4x128xf32>
    %93 = tpu.concatenate %92, %90 in 0 : vector<4x128xf32>, vector<4x128xf32> -> vector<8x128xf32>
    %c0_39 = arith.constant 0 : index
    %c0_40 = arith.constant 0 : index
    %c0_41 = arith.constant 0 : index
    %94 = vector.load %arg9[%c0_39, %c0_40, %c0_41] : memref<1x8x128xf32, #tpu.memory_space<vmem>>, vector<1x8x128xf32>
    %95 = vector.shape_cast %94 : vector<1x8x128xf32> to vector<8x128xf32>
    %96 = vector.shape_cast %93 : vector<8x128xf32> to vector<1x8x128xf32>
    tpu.vector_store %arg9[%c0_39, %c0_40, %c0_41], %96 {strides = array<i32>} : memref<1x8x128xf32, #tpu.memory_space<vmem>>, vector<1x8x128xf32>,
    return
  }
  func.func @transform_0(%arg0: i32, %arg1: i32) -> (i32, i32, i32) {
    %c0_i32 = arith.constant 0 : i32
    %c0_i32_0 = arith.constant 0 : i32
    return %arg0, %c0_i32, %arg1 : i32, i32, i32
  }
  func.func @transform_1(%arg0: i32, %arg1: i32) -> (i32, i32, i32) {
    %c0_i32 = arith.constant 0 : i32
    %c0_i32_0 = arith.constant 0 : i32
    return %arg0, %c0_i32, %arg1 : i32, i32, i32
  }
  func.func @transform_2(%arg0: i32, %arg1: i32) -> (i32, i32, i32, i32) {
    %c0_i32 = arith.constant 0 : i32
    %c0_i32_0 = arith.constant 0 : i32
    %c0_i32_1 = arith.constant 0 : i32
    return %arg0, %arg1, %c0_i32, %c0_i32_0 : i32, i32, i32, i32
  }
  func.func @transform_3(%arg0: i32, %arg1: i32) -> (i32, i32, i32, i32) {
    %c0_i32 = arith.constant 0 : i32
    %c0_i32_0 = arith.constant 0 : i32
    %c0_i32_1 = arith.constant 0 : i32
    return %arg0, %arg1, %c0_i32, %c0_i32_0 : i32, i32, i32, i32
  }
  func.func @transform_4(%arg0: i32, %arg1: i32) -> (i32, i32) {
    %c0_i32 = arith.constant 0 : i32
    %c0_i32_0 = arith.constant 0 : i32
    %c0_i32_1 = arith.constant 0 : i32
    return %c0_i32, %c0_i32_0 : i32, i32
  }
  func.func @transform_5(%arg0: i32, %arg1: i32) -> (i32, i32) {
    %c0_i32 = arith.constant 0 : i32
    %c0_i32_0 = arith.constant 0 : i32
    %c0_i32_1 = arith.constant 0 : i32
    return %c0_i32, %c0_i32_0 : i32, i32
  }
  func.func @transform_6(%arg0: i32, %arg1: i32) -> (i32, i32) {
    %c0_i32 = arith.constant 0 : i32
    %c0_i32_0 = arith.constant 0 : i32
    %c0_i32_1 = arith.constant 0 : i32
    return %c0_i32, %c0_i32_0 : i32, i32
  }
  func.func @transform_7(%arg0: i32, %arg1: i32) -> (i32, i32, i32) {
    %c0_i32 = arith.constant 0 : i32
    %c0_i32_0 = arith.constant 0 : i32
    return %arg0, %c0_i32, %arg1 : i32, i32, i32
  }
}

</mosaic_0001>

<llo_original>
// kernel: bottleneck_block_forward.2
$region0: #{bottleneck_block_forward.2}
  #allocation0 [shape = 'u32[]', space=smem, size = 0x4, offset = 0x4, fixed_abs, tag = 'smem constant byte address 0x4 - core index']
  #allocation1 [shape = 'u32[72,128]{1,0:T(1,128)}', space=vmem, size = 0x9000, scoped, tag = 'internal scratch']
  %s0 = inlined_call_operand.vmem [shape: f32[2,4,256], index: 0, kind: input, shape index: {}]
  %s1 = inlined_call_operand.vmem [shape: f32[4,1], index: 1, kind: input, shape index: {}]
  %s2 = inlined_call_operand.vmem [shape: f32[4,1], index: 2, kind: input, shape index: {}]
  %s3 = inlined_call_operand.vmem [shape: f32[16,4], index: 3, kind: input, shape index: {}]
  %s4 = inlined_call_operand.vmem [shape: bf16[2,16,256], index: 4, kind: output, shape index: {0}]
  %s5 = inlined_call_operand.vmem [shape: f32[2,16,2], index: 5, kind: output, shape index: {1}]
  %6 = xla_tuple %s4, %s5
  %s7 = sld [smem:[#allocation0]]
  $region98: #{bottleneck_block_forward.2} parent=0
    _
  %s9 = ssub.s32 1, %s7
  %s10 = scalar_select 0, %s9, %s7
  $region1: #{bottleneck_block_forward.2} parent=0
    #allocation2 [shape = 'u8[8192]{0}', space=vmem, size = 0x2000, scoped, tag = 'output window, operand 0']
    loop: start=0, step=1, limit=6
    $region2: #{bottleneck_block_forward.2} parent=1 // loop_pre_header
      _
    $region3: #{bottleneck_block_forward.2} parent=1 // loop_header
      %s12 = sphi 0, %s16
      %p13 = scmp.ge.s32.totalorder %s12, 6
      %s19 = sphi 0, %s31
      %s20 = sphi 0, %s27
      %s21 = sphi 0, %s19
      %s22 = sphi 0, %s20
      %s23 = sphi 0, %s21
      %s24 = sphi 0, %s22
      %s36 = sphi 0, %s38
      %s39 = sphi 0, %s36
      %s40 = sphi 0, %s39
      %s56 = sphi 0, %s40
      %s60 = sphi 0, %s60
      %s62 = sphi 0, %s60
      %s63 = sphi 0, %s62
      %s77 = sphi 0, %s63
      %s81 = sphi 0, %s81
      %s83 = sphi 0, %s81
      %s84 = sphi 0, %s83
      %s98 = sphi 0, %s84
      %s102 = sphi 0, %s102
      %s104 = sphi 0, %s102
      %s105 = sphi 0, %s104
      %s119 = sphi 0, %s105
      %s127 = sphi 0, %s129
      %s130 = sphi 0, %s127
      %s131 = sphi 0, %s130
      %s147 = sphi 0, %s131
      %s153 = sphi 0, %s155
      %s156 = sphi 0, %s153
      %s157 = sphi 0, %s156
      %s173 = sphi 0, %s157
    $region4: #{bottleneck_block_forward.2} parent=1 // loop_header_branch
      %15 = sbr.rel (%p13) target = $region8
    $region5: #{bottleneck_block_forward.2} parent=1 // loop_body
      %s17 = ssub.s32 %s12, 1
      %s18 = ssub.s32 %s12, 2
      %s25 = sadd.s32 1, %s20
      %p26 = scmp.ge.s32.totalorder %s25, 2
      %s27 = scalar_select %p26, 0, %s25
      %s28 = sadd.s32 1, %s19
      %s29 = scalar_select %p26, %s28, %s19
      %p30 = scmp.ge.s32.totalorder %s29, 2
      %s31 = scalar_select %p30, 0, %s29
      %s32 = ssub.s32 %s19, %s31
      %s33 = ssub.s32 %s20, %s27
      %s34 = sor.u32 %s32, %s33
      %p35 = scmp.eq.s32.totalorder %s34, 0
      %s37 = sadd.s32 %s36, 1
      %s38 = scalar_select %p35, %s36, %s37
      %p41 = pneg %p35
      %p42 = scmp.eq.s32.totalorder %s12, 3
      %p43 = por %p41, %p42
      %p44 = scmp.ne.s32.totalorder %s36, %s39
      %p45 = scmp.eq.s32.totalorder %s12, 0
      %p46 = por %p44, %p45
      %p47 = scmp.ne.s32.totalorder %s36, %s39
      %p48 = scmp.eq.s32.totalorder %s17, 3
      %p49 = por %p47, %p48
      %p50 = scmp.ne.s32.totalorder %s39, %s40
      %p51 = scmp.eq.s32.totalorder %s17, 0
      %p52 = por %p50, %p51
      %p53 = scmp.ne.s32.totalorder %s39, %s40
      %p54 = scmp.eq.s32.totalorder %s18, 3
      %p55 = por %p53, %p54
      %p57 = scmp.ne.s32.totalorder %s40, %s56
      %p58 = scmp.eq.s32.totalorder %s18, 0
      %p59 = por %p57, %p58
      %s61 = sadd.s32 %s60, 1
      %p64 = scmp.eq.s32.totalorder %s12, 3
      %p65 = scmp.ne.s32.totalorder %s60, %s62
      %p66 = scmp.eq.s32.totalorder %s12, 0
      %p67 = por %p65, %p66
      %p68 = scmp.ne.s32.totalorder %s60, %s62
      %p69 = scmp.eq.s32.totalorder %s17, 3
      %p70 = por %p68, %p69
      %p71 = scmp.ne.s32.totalorder %s62, %s63
      %p72 = scmp.eq.s32.totalorder %s17, 0
      %p73 = por %p71, %p72
      %p74 = scmp.ne.s32.totalorder %s62, %s63
      %p75 = scmp.eq.s32.totalorder %s18, 3
      %p76 = por %p74, %p75
      %p78 = scmp.ne.s32.totalorder %s63, %s77
      %p79 = scmp.eq.s32.totalorder %s18, 0
      %p80 = por %p78, %p79
      %s82 = sadd.s32 %s81, 1
      %p85 = scmp.eq.s32.totalorder %s12, 3
      %p86 = scmp.ne.s32.totalorder %s81, %s83
      %p87 = scmp.eq.s32.totalorder %s12, 0
      %p88 = por %p86, %p87
      %p89 = scmp.ne.s32.totalorder %s81, %s83
      %p90 = scmp.eq.s32.totalorder %s17, 3
      %p91 = por %p89, %p90
      %p92 = scmp.ne.s32.totalorder %s83, %s84
      %p93 = scmp.eq.s32.totalorder %s17, 0
      %p94 = por %p92, %p93
      %p95 = scmp.ne.s32.totalorder %s83, %s84
      %p96 = scmp.eq.s32.totalorder %s18, 3
      %p97 = por %p95, %p96
      %p99 = scmp.ne.s32.totalorder %s84, %s98
      %p100 = scmp.eq.s32.totalorder %s18, 0
      %p101 = por %p99, %p100
      %s103 = sadd.s32 %s102, 1
      %p106 = scmp.eq.s32.totalorder %s12, 3
      %p107 = scmp.ne.s32.totalorder %s102, %s104
      %p108 = scmp.eq.s32.totalorder %s12, 0
      %p109 = por %p107, %p108
      %p110 = scmp.ne.s32.totalorder %s102, %s104
      %p111 = scmp.eq.s32.totalorder %s17, 3
      %p112 = por %p110, %p111
      %p113 = scmp.ne.s32.totalorder %s104, %s105
      %p114 = scmp.eq.s32.totalorder %s17, 0
      %p115 = por %p113, %p114
      %p116 = scmp.ne.s32.totalorder %s104, %s105
      %p117 = scmp.eq.s32.totalorder %s18, 3
      %p118 = por %p116, %p117
      %p120 = scmp.ne.s32.totalorder %s105, %s119
      %p121 = scmp.eq.s32.totalorder %s18, 0
      %p122 = por %p120, %p121
      %s123 = ssub.s32 %s19, %s31
      %s124 = ssub.s32 %s20, %s27
      %s125 = sor.u32 %s123, %s124
      %p126 = scmp.eq.s32.totalorder %s125, 0
      %s128 = sadd.s32 %s127, 1
      %s129 = scalar_select %p126, %s127, %s128
      %p132 = pneg %p126
      %p133 = scmp.eq.s32.totalorder %s12, 3
      %p134 = por %p132, %p133
      %p135 = scmp.ne.s32.totalorder %s127, %s130
      %p136 = scmp.eq.s32.totalorder %s12, 0
      %p137 = por %p135, %p136
      %p138 = scmp.ne.s32.totalorder %s127, %s130
      %p139 = scmp.eq.s32.totalorder %s17, 3
      %p140 = por %p138, %p139
      %p141 = scmp.ne.s32.totalorder %s130, %s131
      %p142 = scmp.eq.s32.totalorder %s17, 0
      %p143 = por %p141, %p142
      %p144 = scmp.ne.s32.totalorder %s130, %s131
      %p145 = scmp.eq.s32.totalorder %s18, 3
      %p146 = por %p144, %p145
      %p148 = scmp.ne.s32.totalorder %s131, %s147
      %p149 = scmp.eq.s32.totalorder %s18, 0
      %p150 = por %p148, %p149
      %s151 = ssub.s32 %s19, %s31
      %p152 = scmp.eq.s32.totalorder %s151, 0
      %s154 = sadd.s32 %s153, 1
      %s155 = scalar_select %p152, %s153, %s154
      %p158 = pneg %p152
      %p159 = scmp.eq.s32.totalorder %s12, 3
      %p160 = por %p158, %p159
      %p161 = scmp.ne.s32.totalorder %s153, %s156
      %p162 = scmp.eq.s32.totalorder %s12, 0
      %p163 = por %p161, %p162
      %p164 = scmp.ne.s32.totalorder %s153, %s156
      %p165 = scmp.eq.s32.totalorder %s17, 3
      %p166 = por %p164, %p165
      %p167 = scmp.ne.s32.totalorder %s156, %s157
      %p168 = scmp.eq.s32.totalorder %s17, 0
      %p169 = por %p167, %p168
      %p170 = scmp.ne.s32.totalorder %s156, %s157
      %p171 = scmp.eq.s32.totalorder %s18, 3
      %p172 = por %p170, %p171
      %p174 = scmp.ne.s32.totalorder %s157, %s173
      %p175 = scmp.eq.s32.totalorder %s18, 0
      %p176 = por %p174, %p175
      %p177 = scmp.le.s32.totalorder 1, %s12
      %p178 = scmp.lt.s32.totalorder %s12, 5
      %p179 = pnand %p177, %p178
      %p180 = pneg %p179
      // Predicated region
      $region9: #{bottleneck_block_forward.2} parent=5 // pred_check
        _
      $region10: #{bottleneck_block_forward.2} parent=5 // pred_check_branch
        %182 = sbr.rel (%p179) target = $region12
      $region11: #{bottleneck_block_forward.2} parent=5 // pred_region
        %s183 = ssub.s32 %s12, 1
        // Predicated region
        $region13: #{bottleneck_block_forward.2} parent=11 // pred_check
          %p184 = pneg %p73
        $region14: #{bottleneck_block_forward.2} parent=11 // pred_check_branch
          %186 = sbr.rel (%p184) target = $region16
        $region15: #{bottleneck_block_forward.2} parent=11 // pred_region
          _
        $region16: #{bottleneck_block_forward.2} parent=11 // pred_fallthru
          _
        // Predicated region
        $region17: #{bottleneck_block_forward.2} parent=11 // pred_check
          %p187 = pneg %p94
        $region18: #{bottleneck_block_forward.2} parent=11 // pred_check_branch
          %189 = sbr.rel (%p187) target = $region20
        $region19: #{bottleneck_block_forward.2} parent=11 // pred_region
          _
        $region20: #{bottleneck_block_forward.2} parent=11 // pred_fallthru
          _
        // Predicated region
        $region21: #{bottleneck_block_forward.2} parent=11 // pred_check
          %p190 = pneg %p115
        $region22: #{bottleneck_block_forward.2} parent=11 // pred_check_branch
          %192 = sbr.rel (%p190) target = $region24
        $region23: #{bottleneck_block_forward.2} parent=11 // pred_region
          _
        $region24: #{bottleneck_block_forward.2} parent=11 // pred_fallthru
          _
      $region12: #{bottleneck_block_forward.2} parent=5 // pred_fallthru
        _
      %p193 = scmp.lt.s32.totalorder %s12, 4
      // Predicated region
      $region25: #{bottleneck_block_forward.2} parent=5 // pred_check
        %p194 = pneg %p193
      $region26: #{bottleneck_block_forward.2} parent=5 // pred_check_branch
        %196 = sbr.rel (%p194) target = $region28
      $region27: #{bottleneck_block_forward.2} parent=5 // pred_region
        // Predicated region
        $region29: #{bottleneck_block_forward.2} parent=27 // pred_check
          %p197 = pneg %p46
        $region30: #{bottleneck_block_forward.2} parent=27 // pred_check_branch
          %199 = sbr.rel (%p197) target = $region32
        $region31: #{bottleneck_block_forward.2} parent=27 // pred_region
          %p200 = scmp.lt.s32.totalorder %s19, 1
          %s201 = scalar_select %p200, %s19, 1
          %p202 = scmp.lt.s32.totalorder %s20, 1
          %s203 = scalar_select %p202, %s20, 1
          %s204 = smul.addr %s201, 2
          %s205 = sadd.s32 %s203, %s204
          %s206 = smul.addr %s205, 4
          %s207 = scalar_lea.vmem %s0, %s206
        $region32: #{bottleneck_block_forward.2} parent=27 // pred_fallthru
          _
      $region28: #{bottleneck_block_forward.2} parent=5 // pred_fallthru
        _
      %p208 = scmp.le.s32.totalorder 1, %s12
      %p209 = scmp.lt.s32.totalorder %s12, 5
      %p210 = pnand %p208, %p209
      %p211 = pneg %p210
      // Predicated region
      $region33: #{bottleneck_block_forward.2} parent=5 // pred_check
        _
      $region34: #{bottleneck_block_forward.2} parent=5 // pred_check_branch
        %213 = sbr.rel (%p210) target = $region36
      $region35: #{bottleneck_block_forward.2} parent=5 // pred_region
        %s214 = ssub.s32 %s12, 1
        %p215 = scmp.lt.s32.totalorder %s21, 1
        %s216 = scalar_select %p215, %s21, 1
        %p217 = scmp.lt.s32.totalorder %s22, 1
        %s218 = scalar_select %p217, %s22, 1
        %s219 = smul.addr %s216, 2
        %s220 = sadd.s32 %s218, %s219
        %s221 = smul.addr %s220, 4
        %s222 = scalar_lea.vmem %s0, %s221
        %p223 = pneg %p52
        %p224 = pneg %p49
        %p225 = pneg %p73
        %p226 = pneg %p70
        %p227 = pneg %p94
        %p228 = pneg %p91
        %p229 = pneg %p115
        %p230 = pneg %p112
        %p231 = pneg %p143
        %p232 = pneg %p140
        %s233 = sand.u32 %s130, 1
        %s234 = sand.u32 %s130, 1
        %s235 = smul.addr %s234, 8
        %s236 = scalar_lea.vmem [#allocation2], %s235
        %p237 = pneg %p169
        %p238 = pneg %p166
        %p239 = scmp.lt.s32.totalorder %s21, 1
        %s240 = scalar_select %p239, %s21, 1
        %s241 = smul.addr %s240, 2
        %s242 = smul.addr %s241, 8
        %s243 = scalar_lea.vmem %s5, %s242
        %p244 = scmp.lt.s32.totalorder %s21, 1
        %s245 = scalar_select %p244, %s21, 1
        %p246 = scmp.lt.s32.totalorder %s22, 1
        %s247 = scalar_select %p246, %s22, 1
        %s248 = smul.addr %s245, 2
        %s249 = sadd.s32 %s247, %s248
        %s250 = smul.addr %s249, 4
        %s251 = scalar_lea.vmem %s0, %s250
        %p252 = scmp.lt.s32.totalorder %s21, 1
        %s253 = scalar_select %p252, %s21, 1
        %s254 = smul.addr %s253, 2
        %s255 = smul.addr %s254, 8
        %s256 = scalar_lea.vmem %s5, %s255
        %v257 = vld [vmem:[%s251] sm:$0xf]
        %v258 = vld [vmem:[%s1] sm:$0xf]
        %260 = vset.pattern.permute.xlu0 0
        %261 = vperm.xlu0 %260, %v258
        %v262 = vpop.permute.xlu0 %261
        %v264 = vmul.f32 %v257, %v262
        %v265 = vld [vmem:[%s2] sm:$0xf]
        %267 = vset.pattern.permute.xlu0 0
        %268 = vperm.xlu0 %267, %v265
        %v269 = vpop.permute.xlu0 %268
        %v271 = vadd.f32 %v264, %v269
        %v272 = vmax.f32 %v271, 0.0
        %v273 = vld [vmem:[%s3] sm:$0xff]
        %v274 = vld [vmem:[%s3 + $0x8] sm:$0xff]
        %vm275 = vcmask 31744
        %v277 = vsel %vm275, %v273, 0
        %v280 = vsel %vm275, %v274, 0
        %vm282 = vcmask 1043456
        %v284 = vsel %vm282, %v272, 0
        %286 = vmatpush.msra.mxu0 0.0
        %287 = vmatpush.msra.mxu0 0.0
        %288 = vmatpush.msra.mxu0 0.0
        %289 = vmatpush.msra.mxu0 0.0
        %290 = vmatpush.msra.mxu0 0.0
        %291 = vmatpush.msra.mxu0 0.0
        %292 = vmatpush.msra.mxu0 0.0
        %293 = vmatpush.msra.mxu0 0.0
        %294 = vmatpush.msra.mxu0 0.0
        %295 = vmatpush.msra.mxu0 0.0
        %296 = vmatpush.msra.mxu0 0.0
        %297 = vmatpush.msra.mxu0 0.0
        %298 = vmatpush.msra.mxu0 0.0
        %299 = vmatpush.msra.mxu0 0.0
        %300 = vmatpush.msra.mxu0 0.0
        %301 = vmatpush.msra.mxu0 %v284
        %302 = vmatmul.f32.gmra.mxu0 %v277
        %v303 = vpop.f32.mrf.mxu0
        %v304 = vadd.f32 0.0, %v303
        %305 = vmatmul.f32.gmra.mxu0 %v280
        %v306 = vpop.f32.mrf.mxu0
        %v307 = vadd.f32 0.0, %v306
        %308 = vdwg.mxu0
        %v309 = vpack.c.bf16 %v304, %v304
        %v310 = vpack.c.bf16 %v307, %v307
        %311 = vst [vmem:[%s236] sm:$0xf] %v309
        %312 = vst [vmem:[%s236 + $0x4] sm:$0xf] %v310
        %p313 = scmp.eq.s32.totalorder %s22, 0
        // Predicated region
        $region37: #{bottleneck_block_forward.2} parent=35 // pred_check
          %p314 = pneg %p313
        $region38: #{bottleneck_block_forward.2} parent=35 // pred_check_branch
          %316 = sbr.rel (%p314) target = $region40
        $region39: #{bottleneck_block_forward.2} parent=35 // pred_region
          %vm317 = vcmask 15360
          %318 = vst.msk [vmem:[%s256] sm:$0xff] %vm317, 0.0
          %319 = vst.msk [vmem:[%s256 + $0x8] sm:$0xff] %vm317, 0.0
        $region40: #{bottleneck_block_forward.2} parent=35 // pred_fallthru
          _
        %320 = vadd.xlane.f32.xlu0 %v304
        %v321 = vpop.xlane.xlu0 %320
        %322 = vadd.xlane.f32.xlu0 %v307
        %v323 = vpop.xlane.xlu0 %322
        %v324 = vmul.f32 %v304, %v304
        %v325 = vmul.f32 %v307, %v307
        %326 = vadd.xlane.f32.xlu0 %v324
        %v327 = vpop.xlane.xlu0 %326
        %328 = vadd.xlane.f32.xlu0 %v325
        %v329 = vpop.xlane.xlu0 %328
        %v330 = vld [vmem:[%s256] sm:$0xff]
        %v331 = vld [vmem:[%s256 + $0x8] sm:$0xff]
        %vm332 = vcmask 7168
        %v333 = vsel %vm332, %v321, %v327
        %v334 = vsel %vm332, %v323, %v329
        %v335 = vadd.f32 %v330, %v333
        %v336 = vadd.f32 %v331, %v334
        %vm337 = vcmask 15360
        %338 = vst.msk [vmem:[%s256] sm:$0xff] %vm337, %v335
        %339 = vst.msk [vmem:[%s256 + $0x8] sm:$0xff] %vm337, %v336
        %s340 = sand.u32 %s130, 1
        %s341 = sand.u32 %s130, 1
        %s342 = smul.addr %s341, 8
        %s343 = scalar_lea.vmem [#allocation2], %s342
        %p344 = scmp.lt.s32.totalorder %s21, 1
        %s345 = scalar_select %p344, %s21, 1
        %s346 = smul.addr %s345, 2
        %s347 = smul.addr %s346, 8
        %s348 = scalar_lea.vmem %s5, %s347
        // Predicated region
        $region41: #{bottleneck_block_forward.2} parent=35 // pred_check
          %p349 = pneg %p140
        $region42: #{bottleneck_block_forward.2} parent=35 // pred_check_branch
          %351 = sbr.rel (%p349) target = $region44
        $region43: #{bottleneck_block_forward.2} parent=35 // pred_region
          %s352 = smul.addr %s21, 4
          %s353 = sadd.s32 %s22, %s352
          %s354 = smul.addr %s353, 4
          %s355 = scalar_lea.vmem %s4, %s354
          // Predicated region
          $region45: #{bottleneck_block_forward.2} parent=43 // pred_check
            _
          $region46: #{bottleneck_block_forward.2} parent=43 // pred_check_branch
            %357 = sbr.rel (0) target = $region48
          $region47: #{bottleneck_block_forward.2} parent=43 // pred_region
            // Predicated region
            $region49: #{bottleneck_block_forward.2} parent=47 // pred_check
              _
            $region50: #{bottleneck_block_forward.2} parent=47 // pred_check_branch
              %359 = sbr.rel target = $region52
            $region51: #{bottleneck_block_forward.2} parent=47 // pred_region
              // Predicated region
              $region64: #{bottleneck_block_forward.2} parent=51 // pred_check
                _
              $region65: #{bottleneck_block_forward.2} parent=51 // pred_check_branch
                %377 = sbr.rel (0) target = $region67
              $region66: #{bottleneck_block_forward.2} parent=51 // pred_region
                loop: start=0, step=1, limit=1
                $region68: #{bottleneck_block_forward.2} parent=66 // loop_pre_header
                  _
                $region69: #{bottleneck_block_forward.2} parent=66 // loop_header
                  %s379 = sphi 0, %s383
                  %p380 = scmp.ge.s32.totalorder %s379, 1
                  %s384 = sphi %s343, %s343
                  %s385 = sphi %s355, %s355
                $region70: #{bottleneck_block_forward.2} parent=66 // loop_header_branch
                  %382 = sbr.rel (%p380) target = $region74
                $region71: #{bottleneck_block_forward.2} parent=66 // loop_body
                  _
                $region72: #{bottleneck_block_forward.2} parent=66 // loop_footer
                  %s383 = sadd.s32 1, %s379
                $region73: #{bottleneck_block_forward.2} parent=66 // loop_footer_branch
                  %378 = sbr.rel target = $region69
                $region74: #{bottleneck_block_forward.2} parent=66 // loop_exit
                  _
                %s387 = ssub.s32 16, 1
                loop: start=0, step=1, limit=1
                $region75: #{bottleneck_block_forward.2} parent=66 // loop_pre_header
                  _
                $region76: #{bottleneck_block_forward.2} parent=66 // loop_header
                  %s389 = sphi 0, %s393
                  %p390 = scmp.ge.s32.totalorder %s389, 1
                  %s394 = sphi %s343, %s343
                  %s395 = sphi %s355, %s355
                $region77: #{bottleneck_block_forward.2} parent=66 // loop_header_branch
                  %392 = sbr.rel (%p390) target = $region81
                $region78: #{bottleneck_block_forward.2} parent=66 // loop_body
                  %v396 = vld [vmem:[%s394] sm:%s387]
                  %397 = vst [vmem:[%s395] sm:%s387] %v396
                  %v398 = vld [vmem:[%s394 + $0x4] sm:%s387]
                  %399 = vst [vmem:[%s395 + $0x8] sm:%s387] %v398
                $region79: #{bottleneck_block_forward.2} parent=66 // loop_footer
                  %s393 = sadd.s32 1, %s389
                $region80: #{bottleneck_block_forward.2} parent=66 // loop_footer_branch
                  %388 = sbr.rel target = $region76
                $region81: #{bottleneck_block_forward.2} parent=66 // loop_exit
                  _
              $region67: #{bottleneck_block_forward.2} parent=51 // pred_fallthru
                _
            $region52: #{bottleneck_block_forward.2} parent=47 // pred_fallthru
              _
            // Predicated region
            $region53: #{bottleneck_block_forward.2} parent=47 // pred_check
              _
            $region54: #{bottleneck_block_forward.2} parent=47 // pred_check_branch
              %361 = sbr.rel (0) target = $region56
            $region55: #{bottleneck_block_forward.2} parent=47 // pred_region
              %s363 = ssub.s32 16, 1
              loop: start=0, step=1, limit=1
              $region57: #{bottleneck_block_forward.2} parent=55 // loop_pre_header
                _
              $region58: #{bottleneck_block_forward.2} parent=55 // loop_header
                %s365 = sphi 0, %s369
                %p366 = scmp.ge.s32.totalorder %s365, 1
                %s370 = sphi %s343, %s343
                %s371 = sphi %s355, %s355
              $region59: #{bottleneck_block_forward.2} parent=55 // loop_header_branch
                %368 = sbr.rel (%p366) target = $region63
              $region60: #{bottleneck_block_forward.2} parent=55 // loop_body
                %v372 = vld [vmem:[%s370] sm:%s363]
                %373 = vst [vmem:[%s371] sm:%s363] %v372
                %v374 = vld [vmem:[%s370 + $0x4] sm:%s363]
                %375 = vst [vmem:[%s371 + $0x8] sm:%s363] %v374
              $region61: #{bottleneck_block_forward.2} parent=55 // loop_footer
                %s369 = sadd.s32 1, %s365
              $region62: #{bottleneck_block_forward.2} parent=55 // loop_footer_branch
                %364 = sbr.rel target = $region58
              $region63: #{bottleneck_block_forward.2} parent=55 // loop_exit
                _
            $region56: #{bottleneck_block_forward.2} parent=47 // pred_fallthru
              _
          $region48: #{bottleneck_block_forward.2} parent=43 // pred_fallthru
            _
          %400 = vnop
        $region44: #{bottleneck_block_forward.2} parent=35 // pred_fallthru
          _
        // Predicated region
        $region82: #{bottleneck_block_forward.2} parent=35 // pred_check
          %p401 = pneg %p166
        $region83: #{bottleneck_block_forward.2} parent=35 // pred_check_branch
          %403 = sbr.rel (%p401) target = $region85
        $region84: #{bottleneck_block_forward.2} parent=35 // pred_region
          _
        $region85: #{bottleneck_block_forward.2} parent=35 // pred_fallthru
          _
      $region36: #{bottleneck_block_forward.2} parent=5 // pred_fallthru
        _
      %p404 = scmp.le.s32.totalorder 2, %s12
      // Predicated region
      $region86: #{bottleneck_block_forward.2} parent=5 // pred_check
        %p405 = pneg %p404
      $region87: #{bottleneck_block_forward.2} parent=5 // pred_check_branch
        %407 = sbr.rel (%p405) target = $region89
      $region88: #{bottleneck_block_forward.2} parent=5 // pred_region
        %s408 = ssub.s32 %s12, 2
        // Predicated region
        $region90: #{bottleneck_block_forward.2} parent=88 // pred_check
          %p409 = pneg %p146
        $region91: #{bottleneck_block_forward.2} parent=88 // pred_check_branch
          %411 = sbr.rel (%p409) target = $region93
        $region92: #{bottleneck_block_forward.2} parent=88 // pred_region
          %s412 = sand.u32 %s131, 1
          %s413 = sand.u32 %s131, 1
          %s414 = smul.addr %s413, 8
          %s415 = scalar_lea.vmem [#allocation2], %s414
        $region93: #{bottleneck_block_forward.2} parent=88 // pred_fallthru
          _
        // Predicated region
        $region94: #{bottleneck_block_forward.2} parent=88 // pred_check
          %p416 = pneg %p172
        $region95: #{bottleneck_block_forward.2} parent=88 // pred_check_branch
          %418 = sbr.rel (%p416) target = $region97
        $region96: #{bottleneck_block_forward.2} parent=88 // pred_region
          %p419 = scmp.lt.s32.totalorder %s23, 1
          %s420 = scalar_select %p419, %s23, 1
          %s421 = smul.addr %s420, 2
          %s422 = smul.addr %s421, 8
          %s423 = scalar_lea.vmem %s5, %s422
        $region97: #{bottleneck_block_forward.2} parent=88 // pred_fallthru
          _
      $region89: #{bottleneck_block_forward.2} parent=5 // pred_fallthru
        _
    $region6: #{bottleneck_block_forward.2} parent=1 // loop_footer
      %s16 = sadd.s32 1, %s12
    $region7: #{bottleneck_block_forward.2} parent=1 // loop_footer_branch
      %11 = sbr.rel target = $region3
    $region8: #{bottleneck_block_forward.2} parent=1 // loop_exit
      _

// kernel: bottleneck_block_forward.3
$region0: #{bottleneck_block_forward.3}
  #allocation0 [shape = 'u32[]', space=smem, size = 0x4, offset = 0x4, fixed_abs, tag = 'smem constant byte address 0x4 - core index']
  #allocation1 [shape = 'u32[72,128]{1,0:T(1,128)}', space=vmem, size = 0x9000, scoped, tag = 'internal scratch']
  #allocation2 [shape = 'f32[144,128]{1,0:T(8,128)}', space=vmem, size = 0x12000, scoped, tag = 'scratch operand']
  %s0 = inlined_call_operand.vmem [shape: f32[2,4,256], index: 0, kind: input, shape index: {}]
  %s1 = inlined_call_operand.vmem [shape: bf16[2,16,256], index: 1, kind: input, shape index: {}]
  %s2 = inlined_call_operand.vmem [shape: bf16[2,2,16,16], index: 2, kind: input, shape index: {}]
  %s3 = inlined_call_operand.vmem [shape: bf16[2,2,16,16], index: 3, kind: input, shape index: {}]
  %s4 = inlined_call_operand.vmem [shape: f32[16,1], index: 4, kind: input, shape index: {}]
  %s5 = inlined_call_operand.vmem [shape: f32[16,1], index: 5, kind: input, shape index: {}]
  %s6 = inlined_call_operand.vmem [shape: f32[4,144], index: 6, kind: input, shape index: {}]
  %s7 = inlined_call_operand.vmem [shape: f32[2,8,256], index: 7, kind: output, shape index: {}]
  %s8 = sld [smem:[#allocation0]]
  $region102: #{bottleneck_block_forward.3} parent=0
    _
  %s10 = ssub.s32 1, %s8
  %s11 = scalar_select 0, %s10, %s8
  $region1: #{bottleneck_block_forward.3} parent=0
    #allocation3 [shape = 'u8[8192]{0}', space=vmem, size = 0x2000, scoped, tag = 'input window, operand 1']
    loop: start=0, step=1, limit=6
    $region2: #{bottleneck_block_forward.3} parent=1 // loop_pre_header
      _
    $region3: #{bottleneck_block_forward.3} parent=1 // loop_header
      %s13 = sphi 0, %s17
      %p14 = scmp.ge.s32.totalorder %s13, 6
      %s20 = sphi 0, %s32
      %s21 = sphi 0, %s28
      %s22 = sphi 0, %s20
      %s23 = sphi 0, %s21
      %s24 = sphi 0, %s22
      %s25 = sphi 0, %s23
      %s37 = sphi 0, %s39
      %s40 = sphi 0, %s37
      %s41 = sphi 0, %s40
      %s57 = sphi 0, %s41
      %s65 = sphi 0, %s67
      %s68 = sphi 0, %s65
      %s69 = sphi 0, %s68
      %s85 = sphi 0, %s69
      %s93 = sphi 0, %s95
      %s96 = sphi 0, %s93
      %s97 = sphi 0, %s96
      %s113 = sphi 0, %s97
      %s121 = sphi 0, %s123
      %s124 = sphi 0, %s121
      %s125 = sphi 0, %s124
      %s141 = sphi 0, %s125
      %s145 = sphi 0, %s145
      %s147 = sphi 0, %s145
      %s148 = sphi 0, %s147
      %s162 = sphi 0, %s148
      %s166 = sphi 0, %s166
      %s168 = sphi 0, %s166
      %s169 = sphi 0, %s168
      %s183 = sphi 0, %s169
      %s187 = sphi 0, %s187
      %s189 = sphi 0, %s187
      %s190 = sphi 0, %s189
      %s204 = sphi 0, %s190
      %s212 = sphi 0, %s214
      %s215 = sphi 0, %s212
      %s216 = sphi 0, %s215
      %s232 = sphi 0, %s216
    $region4: #{bottleneck_block_forward.3} parent=1 // loop_header_branch
      %16 = sbr.rel (%p14) target = $region8
    $region5: #{bottleneck_block_forward.3} parent=1 // loop_body
      %s18 = ssub.s32 %s13, 1
      %s19 = ssub.s32 %s13, 2
      %s26 = sadd.s32 1, %s21
      %p27 = scmp.ge.s32.totalorder %s26, 2
      %s28 = scalar_select %p27, 0, %s26
      %s29 = sadd.s32 1, %s20
      %s30 = scalar_select %p27, %s29, %s20
      %p31 = scmp.ge.s32.totalorder %s30, 2
      %s32 = scalar_select %p31, 0, %s30
      %s33 = ssub.s32 %s20, %s32
      %s34 = ssub.s32 %s21, %s28
      %s35 = sor.u32 %s33, %s34
      %p36 = scmp.eq.s32.totalorder %s35, 0
      %s38 = sadd.s32 %s37, 1
      %s39 = scalar_select %p36, %s37, %s38
      %p42 = pneg %p36
      %p43 = scmp.eq.s32.totalorder %s13, 3
      %p44 = por %p42, %p43
      %p45 = scmp.ne.s32.totalorder %s37, %s40
      %p46 = scmp.eq.s32.totalorder %s13, 0
      %p47 = por %p45, %p46
      %p48 = scmp.ne.s32.totalorder %s37, %s40
      %p49 = scmp.eq.s32.totalorder %s18, 3
      %p50 = por %p48, %p49
      %p51 = scmp.ne.s32.totalorder %s40, %s41
      %p52 = scmp.eq.s32.totalorder %s18, 0
      %p53 = por %p51, %p52
      %p54 = scmp.ne.s32.totalorder %s40, %s41
      %p55 = scmp.eq.s32.totalorder %s19, 3
      %p56 = por %p54, %p55
      %p58 = scmp.ne.s32.totalorder %s41, %s57
      %p59 = scmp.eq.s32.totalorder %s19, 0
      %p60 = por %p58, %p59
      %s61 = ssub.s32 %s20, %s32
      %s62 = ssub.s32 %s21, %s28
      %s63 = sor.u32 %s61, %s62
      %p64 = scmp.eq.s32.totalorder %s63, 0
      %s66 = sadd.s32 %s65, 1
      %s67 = scalar_select %p64, %s65, %s66
      %p70 = pneg %p64
      %p71 = scmp.eq.s32.totalorder %s13, 3
      %p72 = por %p70, %p71
      %p73 = scmp.ne.s32.totalorder %s65, %s68
      %p74 = scmp.eq.s32.totalorder %s13, 0
      %p75 = por %p73, %p74
      %p76 = scmp.ne.s32.totalorder %s65, %s68
      %p77 = scmp.eq.s32.totalorder %s18, 3
      %p78 = por %p76, %p77
      %p79 = scmp.ne.s32.totalorder %s68, %s69
      %p80 = scmp.eq.s32.totalorder %s18, 0
      %p81 = por %p79, %p80
      %p82 = scmp.ne.s32.totalorder %s68, %s69
      %p83 = scmp.eq.s32.totalorder %s19, 3
      %p84 = por %p82, %p83
      %p86 = scmp.ne.s32.totalorder %s69, %s85
      %p87 = scmp.eq.s32.totalorder %s19, 0
      %p88 = por %p86, %p87
      %s89 = ssub.s32 %s20, %s32
      %s90 = ssub.s32 %s21, %s28
      %s91 = sor.u32 %s89, %s90
      %p92 = scmp.eq.s32.totalorder %s91, 0
      %s94 = sadd.s32 %s93, 1
      %s95 = scalar_select %p92, %s93, %s94
      %p98 = pneg %p92
      %p99 = scmp.eq.s32.totalorder %s13, 3
      %p100 = por %p98, %p99
      %p101 = scmp.ne.s32.totalorder %s93, %s96
      %p102 = scmp.eq.s32.totalorder %s13, 0
      %p103 = por %p101, %p102
      %p104 = scmp.ne.s32.totalorder %s93, %s96
      %p105 = scmp.eq.s32.totalorder %s18, 3
      %p106 = por %p104, %p105
      %p107 = scmp.ne.s32.totalorder %s96, %s97
      %p108 = scmp.eq.s32.totalorder %s18, 0
      %p109 = por %p107, %p108
      %p110 = scmp.ne.s32.totalorder %s96, %s97
      %p111 = scmp.eq.s32.totalorder %s19, 3
      %p112 = por %p110, %p111
      %p114 = scmp.ne.s32.totalorder %s97, %s113
      %p115 = scmp.eq.s32.totalorder %s19, 0
      %p116 = por %p114, %p115
      %s117 = ssub.s32 %s20, %s32
      %s118 = ssub.s32 %s21, %s28
      %s119 = sor.u32 %s117, %s118
      %p120 = scmp.eq.s32.totalorder %s119, 0
      %s122 = sadd.s32 %s121, 1
      %s123 = scalar_select %p120, %s121, %s122
      %p126 = pneg %p120
      %p127 = scmp.eq.s32.totalorder %s13, 3
      %p128 = por %p126, %p127
      %p129 = scmp.ne.s32.totalorder %s121, %s124
      %p130 = scmp.eq.s32.totalorder %s13, 0
      %p131 = por %p129, %p130
      %p132 = scmp.ne.s32.totalorder %s121, %s124
      %p133 = scmp.eq.s32.totalorder %s18, 3
      %p134 = por %p132, %p133
      %p135 = scmp.ne.s32.totalorder %s124, %s125
      %p136 = scmp.eq.s32.totalorder %s18, 0
      %p137 = por %p135, %p136
      %p138 = scmp.ne.s32.totalorder %s124, %s125
      %p139 = scmp.eq.s32.totalorder %s19, 3
      %p140 = por %p138, %p139
      %p142 = scmp.ne.s32.totalorder %s125, %s141
      %p143 = scmp.eq.s32.totalorder %s19, 0
      %p144 = por %p142, %p143
      %s146 = sadd.s32 %s145, 1
      %p149 = scmp.eq.s32.totalorder %s13, 3
      %p150 = scmp.ne.s32.totalorder %s145, %s147
      %p151 = scmp.eq.s32.totalorder %s13, 0
      %p152 = por %p150, %p151
      %p153 = scmp.ne.s32.totalorder %s145, %s147
      %p154 = scmp.eq.s32.totalorder %s18, 3
      %p155 = por %p153, %p154
      %p156 = scmp.ne.s32.totalorder %s147, %s148
      %p157 = scmp.eq.s32.totalorder %s18, 0
      %p158 = por %p156, %p157
      %p159 = scmp.ne.s32.totalorder %s147, %s148
      %p160 = scmp.eq.s32.totalorder %s19, 3
      %p161 = por %p159, %p160
      %p163 = scmp.ne.s32.totalorder %s148, %s162
      %p164 = scmp.eq.s32.totalorder %s19, 0
      %p165 = por %p163, %p164
      %s167 = sadd.s32 %s166, 1
      %p170 = scmp.eq.s32.totalorder %s13, 3
      %p171 = scmp.ne.s32.totalorder %s166, %s168
      %p172 = scmp.eq.s32.totalorder %s13, 0
      %p173 = por %p171, %p172
      %p174 = scmp.ne.s32.totalorder %s166, %s168
      %p175 = scmp.eq.s32.totalorder %s18, 3
      %p176 = por %p174, %p175
      %p177 = scmp.ne.s32.totalorder %s168, %s169
      %p178 = scmp.eq.s32.totalorder %s18, 0
      %p179 = por %p177, %p178
      %p180 = scmp.ne.s32.totalorder %s168, %s169
      %p181 = scmp.eq.s32.totalorder %s19, 3
      %p182 = por %p180, %p181
      %p184 = scmp.ne.s32.totalorder %s169, %s183
      %p185 = scmp.eq.s32.totalorder %s19, 0
      %p186 = por %p184, %p185
      %s188 = sadd.s32 %s187, 1
      %p191 = scmp.eq.s32.totalorder %s13, 3
      %p192 = scmp.ne.s32.totalorder %s187, %s189
      %p193 = scmp.eq.s32.totalorder %s13, 0
      %p194 = por %p192, %p193
      %p195 = scmp.ne.s32.totalorder %s187, %s189
      %p196 = scmp.eq.s32.totalorder %s18, 3
      %p197 = por %p195, %p196
      %p198 = scmp.ne.s32.totalorder %s189, %s190
      %p199 = scmp.eq.s32.totalorder %s18, 0
      %p200 = por %p198, %p199
      %p201 = scmp.ne.s32.totalorder %s189, %s190
      %p202 = scmp.eq.s32.totalorder %s19, 3
      %p203 = por %p201, %p202
      %p205 = scmp.ne.s32.totalorder %s190, %s204
      %p206 = scmp.eq.s32.totalorder %s19, 0
      %p207 = por %p205, %p206
      %s208 = ssub.s32 %s20, %s32
      %s209 = ssub.s32 %s21, %s28
      %s210 = sor.u32 %s208, %s209
      %p211 = scmp.eq.s32.totalorder %s210, 0
      %s213 = sadd.s32 %s212, 1
      %s214 = scalar_select %p211, %s212, %s213
      %p217 = pneg %p211
      %p218 = scmp.eq.s32.totalorder %s13, 3
      %p219 = por %p217, %p218
      %p220 = scmp.ne.s32.totalorder %s212, %s215
      %p221 = scmp.eq.s32.totalorder %s13, 0
      %p222 = por %p220, %p221
      %p223 = scmp.ne.s32.totalorder %s212, %s215
      %p224 = scmp.eq.s32.totalorder %s18, 3
      %p225 = por %p223, %p224
      %p226 = scmp.ne.s32.totalorder %s215, %s216
      %p227 = scmp.eq.s32.totalorder %s18, 0
      %p228 = por %p226, %p227
      %p229 = scmp.ne.s32.totalorder %s215, %s216
      %p230 = scmp.eq.s32.totalorder %s19, 3
      %p231 = por %p229, %p230
      %p233 = scmp.ne.s32.totalorder %s216, %s232
      %p234 = scmp.eq.s32.totalorder %s19, 0
      %p235 = por %p233, %p234
      %p236 = scmp.le.s32.totalorder 1, %s13
      %p237 = scmp.lt.s32.totalorder %s13, 5
      %p238 = pnand %p236, %p237
      %p239 = pneg %p238
      // Predicated region
      $region9: #{bottleneck_block_forward.3} parent=5 // pred_check
        _
      $region10: #{bottleneck_block_forward.3} parent=5 // pred_check_branch
        %241 = sbr.rel (%p238) target = $region12
      $region11: #{bottleneck_block_forward.3} parent=5 // pred_region
        %s242 = ssub.s32 %s13, 1
        // Predicated region
        $region13: #{bottleneck_block_forward.3} parent=11 // pred_check
          %p243 = pneg %p158
        $region14: #{bottleneck_block_forward.3} parent=11 // pred_check_branch
          %245 = sbr.rel (%p243) target = $region16
        $region15: #{bottleneck_block_forward.3} parent=11 // pred_region
          _
        $region16: #{bottleneck_block_forward.3} parent=11 // pred_fallthru
          _
        // Predicated region
        $region17: #{bottleneck_block_forward.3} parent=11 // pred_check
          %p246 = pneg %p179
        $region18: #{bottleneck_block_forward.3} parent=11 // pred_check_branch
          %248 = sbr.rel (%p246) target = $region20
        $region19: #{bottleneck_block_forward.3} parent=11 // pred_region
          _
        $region20: #{bottleneck_block_forward.3} parent=11 // pred_fallthru
          _
        // Predicated region
        $region21: #{bottleneck_block_forward.3} parent=11 // pred_check
          %p249 = pneg %p200
        $region22: #{bottleneck_block_forward.3} parent=11 // pred_check_branch
          %251 = sbr.rel (%p249) target = $region24
        $region23: #{bottleneck_block_forward.3} parent=11 // pred_region
          _
        $region24: #{bottleneck_block_forward.3} parent=11 // pred_fallthru
          _
      $region12: #{bottleneck_block_forward.3} parent=5 // pred_fallthru
        _
      %p252 = scmp.lt.s32.totalorder %s13, 4
      // Predicated region
      $region25: #{bottleneck_block_forward.3} parent=5 // pred_check
        %p253 = pneg %p252
      $region26: #{bottleneck_block_forward.3} parent=5 // pred_check_branch
        %255 = sbr.rel (%p253) target = $region28
      $region27: #{bottleneck_block_forward.3} parent=5 // pred_region
        // Predicated region
        $region29: #{bottleneck_block_forward.3} parent=27 // pred_check
          %p256 = pneg %p47
        $region30: #{bottleneck_block_forward.3} parent=27 // pred_check_branch
          %258 = sbr.rel (%p256) target = $region32
        $region31: #{bottleneck_block_forward.3} parent=27 // pred_region
          %p259 = scmp.lt.s32.totalorder %s20, 1
          %s260 = scalar_select %p259, %s20, 1
          %p261 = scmp.lt.s32.totalorder %s21, 1
          %s262 = scalar_select %p261, %s21, 1
          %s263 = smul.addr %s260, 2
          %s264 = sadd.s32 %s262, %s263
          %s265 = smul.addr %s264, 4
          %s266 = scalar_lea.vmem %s0, %s265
        $region32: #{bottleneck_block_forward.3} parent=27 // pred_fallthru
          _
        // Predicated region
        $region33: #{bottleneck_block_forward.3} parent=27 // pred_check
          %p267 = pneg %p75
        $region34: #{bottleneck_block_forward.3} parent=27 // pred_check_branch
          %269 = sbr.rel (%p267) target = $region36
        $region35: #{bottleneck_block_forward.3} parent=27 // pred_region
          %s270 = sand.u32 %s65, 1
          %s271 = sand.u32 %s65, 1
          %s272 = smul.addr %s271, 8
          %s273 = scalar_lea.vmem [#allocation3], %s272
          %s274 = smul.addr %s20, 4
          %s275 = sadd.s32 %s21, %s274
          %s276 = smul.addr %s275, 4
          %s277 = scalar_lea.vmem %s1, %s276
          // Predicated region
          $region37: #{bottleneck_block_forward.3} parent=35 // pred_check
            _
          $region38: #{bottleneck_block_forward.3} parent=35 // pred_check_branch
            %279 = sbr.rel (0) target = $region40
          $region39: #{bottleneck_block_forward.3} parent=35 // pred_region
            // Predicated region
            $region41: #{bottleneck_block_forward.3} parent=39 // pred_check
              _
            $region42: #{bottleneck_block_forward.3} parent=39 // pred_check_branch
              %281 = sbr.rel target = $region44
            $region43: #{bottleneck_block_forward.3} parent=39 // pred_region
              // Predicated region
              $region56: #{bottleneck_block_forward.3} parent=43 // pred_check
                _
              $region57: #{bottleneck_block_forward.3} parent=43 // pred_check_branch
                %299 = sbr.rel (0) target = $region59
              $region58: #{bottleneck_block_forward.3} parent=43 // pred_region
                loop: start=0, step=1, limit=1
                $region60: #{bottleneck_block_forward.3} parent=58 // loop_pre_header
                  _
                $region61: #{bottleneck_block_forward.3} parent=58 // loop_header
                  %s301 = sphi 0, %s305
                  %p302 = scmp.ge.s32.totalorder %s301, 1
                  %s306 = sphi %s277, %s277
                  %s307 = sphi %s273, %s273
                $region62: #{bottleneck_block_forward.3} parent=58 // loop_header_branch
                  %304 = sbr.rel (%p302) target = $region66
                $region63: #{bottleneck_block_forward.3} parent=58 // loop_body
                  _
                $region64: #{bottleneck_block_forward.3} parent=58 // loop_footer
                  %s305 = sadd.s32 1, %s301
                $region65: #{bottleneck_block_forward.3} parent=58 // loop_footer_branch
                  %300 = sbr.rel target = $region61
                $region66: #{bottleneck_block_forward.3} parent=58 // loop_exit
                  _
                %s309 = ssub.s32 16, 1
                loop: start=0, step=1, limit=1
                $region67: #{bottleneck_block_forward.3} parent=58 // loop_pre_header
                  _
                $region68: #{bottleneck_block_forward.3} parent=58 // loop_header
                  %s311 = sphi 0, %s315
                  %p312 = scmp.ge.s32.totalorder %s311, 1
                  %s316 = sphi %s277, %s277
                  %s317 = sphi %s273, %s273
                $region69: #{bottleneck_block_forward.3} parent=58 // loop_header_branch
                  %314 = sbr.rel (%p312) target = $region73
                $region70: #{bottleneck_block_forward.3} parent=58 // loop_body
                  %v318 = vld [vmem:[%s316] sm:%s309]
                  %319 = vst [vmem:[%s317] sm:%s309] %v318
                  %v320 = vld [vmem:[%s316 + $0x8] sm:%s309]
                  %321 = vst [vmem:[%s317 + $0x4] sm:%s309] %v320
                $region71: #{bottleneck_block_forward.3} parent=58 // loop_footer
                  %s315 = sadd.s32 1, %s311
                $region72: #{bottleneck_block_forward.3} parent=58 // loop_footer_branch
                  %310 = sbr.rel target = $region68
                $region73: #{bottleneck_block_forward.3} parent=58 // loop_exit
                  _
              $region59: #{bottleneck_block_forward.3} parent=43 // pred_fallthru
                _
            $region44: #{bottleneck_block_forward.3} parent=39 // pred_fallthru
              _
            // Predicated region
            $region45: #{bottleneck_block_forward.3} parent=39 // pred_check
              _
            $region46: #{bottleneck_block_forward.3} parent=39 // pred_check_branch
              %283 = sbr.rel (0) target = $region48
            $region47: #{bottleneck_block_forward.3} parent=39 // pred_region
              %s285 = ssub.s32 16, 1
              loop: start=0, step=1, limit=1
              $region49: #{bottleneck_block_forward.3} parent=47 // loop_pre_header
                _
              $region50: #{bottleneck_block_forward.3} parent=47 // loop_header
                %s287 = sphi 0, %s291
                %p288 = scmp.ge.s32.totalorder %s287, 1
                %s292 = sphi %s277, %s277
                %s293 = sphi %s273, %s273
              $region51: #{bottleneck_block_forward.3} parent=47 // loop_header_branch
                %290 = sbr.rel (%p288) target = $region55
              $region52: #{bottleneck_block_forward.3} parent=47 // loop_body
                %v294 = vld [vmem:[%s292] sm:%s285]
                %295 = vst [vmem:[%s293] sm:%s285] %v294
                %v296 = vld [vmem:[%s292 + $0x8] sm:%s285]
                %297 = vst [vmem:[%s293 + $0x4] sm:%s285] %v296
              $region53: #{bottleneck_block_forward.3} parent=47 // loop_footer
                %s291 = sadd.s32 1, %s287
              $region54: #{bottleneck_block_forward.3} parent=47 // loop_footer_branch
                %286 = sbr.rel target = $region50
              $region55: #{bottleneck_block_forward.3} parent=47 // loop_exit
                _
            $region48: #{bottleneck_block_forward.3} parent=39 // pred_fallthru
              _
          $region40: #{bottleneck_block_forward.3} parent=35 // pred_fallthru
            _
          %322 = vnop
        $region36: #{bottleneck_block_forward.3} parent=27 // pred_fallthru
          _
        // Predicated region
        $region74: #{bottleneck_block_forward.3} parent=27 // pred_check
          %p323 = pneg %p103
        $region75: #{bottleneck_block_forward.3} parent=27 // pred_check_branch
          %325 = sbr.rel (%p323) target = $region77
        $region76: #{bottleneck_block_forward.3} parent=27 // pred_region
          %p326 = scmp.lt.s32.totalorder %s20, 1
          %s327 = scalar_select %p326, %s20, 1
          %p328 = scmp.lt.s32.totalorder %s21, 1
          %s329 = scalar_select %p328, %s21, 1
          %s330 = smul.addr %s329, 2
          %s331 = smul.addr %s327, 4
          %s332 = sadd.s32 %s330, %s331
          %s333 = smul.addr %s332, 4
          %s334 = scalar_lea.vmem %s2, %s333
        $region77: #{bottleneck_block_forward.3} parent=27 // pred_fallthru
          _
        // Predicated region
        $region78: #{bottleneck_block_forward.3} parent=27 // pred_check
          %p335 = pneg %p131
        $region79: #{bottleneck_block_forward.3} parent=27 // pred_check_branch
          %337 = sbr.rel (%p335) target = $region81
        $region80: #{bottleneck_block_forward.3} parent=27 // pred_region
          %p338 = scmp.lt.s32.totalorder %s20, 1
          %s339 = scalar_select %p338, %s20, 1
          %p340 = scmp.lt.s32.totalorder %s21, 1
          %s341 = scalar_select %p340, %s21, 1
          %s342 = smul.addr %s341, 2
          %s343 = smul.addr %s339, 4
          %s344 = sadd.s32 %s342, %s343
          %s345 = smul.addr %s344, 4
          %s346 = scalar_lea.vmem %s3, %s345
        $region81: #{bottleneck_block_forward.3} parent=27 // pred_fallthru
          _
      $region28: #{bottleneck_block_forward.3} parent=5 // pred_fallthru
        _
      %p347 = scmp.le.s32.totalorder 1, %s13
      %p348 = scmp.lt.s32.totalorder %s13, 5
      %p349 = pnand %p347, %p348
      %p350 = pneg %p349
      // Predicated region
      $region82: #{bottleneck_block_forward.3} parent=5 // pred_check
        _
      $region83: #{bottleneck_block_forward.3} parent=5 // pred_check_branch
        %352 = sbr.rel (%p349) target = $region85
      $region84: #{bottleneck_block_forward.3} parent=5 // pred_region
        %s353 = ssub.s32 %s13, 1
        %s354 = sand.u32 %s68, 1
        %s355 = sand.u32 %s68, 1
        %s356 = smul.addr %s355, 8
        %s357 = scalar_lea.vmem [#allocation3], %s356
        // Predicated region
        $region86: #{bottleneck_block_forward.3} parent=84 // pred_check
          %p358 = pneg %p81
        $region87: #{bottleneck_block_forward.3} parent=84 // pred_check_branch
          %360 = sbr.rel (%p358) target = $region89
        $region88: #{bottleneck_block_forward.3} parent=84 // pred_region
          _
        $region89: #{bottleneck_block_forward.3} parent=84 // pred_fallthru
          _
        %p361 = scmp.lt.s32.totalorder %s22, 1
        %s362 = scalar_select %p361, %s22, 1
        %p363 = scmp.lt.s32.totalorder %s23, 1
        %s364 = scalar_select %p363, %s23, 1
        %s365 = smul.addr %s362, 2
        %s366 = sadd.s32 %s364, %s365
        %s367 = smul.addr %s366, 4
        %s368 = scalar_lea.vmem %s0, %s367
        %p369 = pneg %p53
        %p370 = pneg %p50
        %s371 = sand.u32 %s68, 1
        %s372 = sand.u32 %s68, 1
        %s373 = smul.addr %s372, 8
        %s374 = scalar_lea.vmem [#allocation3], %s373
        %p375 = pneg %p81
        %p376 = pneg %p78
        %p377 = scmp.lt.s32.totalorder %s22, 1
        %s378 = scalar_select %p377, %s22, 1
        %p379 = scmp.lt.s32.totalorder %s23, 1
        %s380 = scalar_select %p379, %s23, 1
        %s381 = smul.addr %s380, 2
        %s382 = smul.addr %s378, 4
        %s383 = sadd.s32 %s381, %s382
        %s384 = smul.addr %s383, 4
        %s385 = scalar_lea.vmem %s2, %s384
        %p386 = pneg %p109
        %p387 = pneg %p106
        %p388 = scmp.lt.s32.totalorder %s22, 1
        %s389 = scalar_select %p388, %s22, 1
        %p390 = scmp.lt.s32.totalorder %s23, 1
        %s391 = scalar_select %p390, %s23, 1
        %s392 = smul.addr %s391, 2
        %s393 = smul.addr %s389, 4
        %s394 = sadd.s32 %s392, %s393
        %s395 = smul.addr %s394, 4
        %s396 = scalar_lea.vmem %s3, %s395
        %p397 = pneg %p137
        %p398 = pneg %p134
        %p399 = pneg %p158
        %p400 = pneg %p155
        %p401 = pneg %p179
        %p402 = pneg %p176
        %p403 = pneg %p200
        %p404 = pneg %p197
        %p405 = pneg %p228
        %p406 = pneg %p225
        %p407 = scmp.lt.s32.totalorder %s22, 1
        %s408 = scalar_select %p407, %s22, 1
        %p409 = scmp.lt.s32.totalorder %s23, 1
        %s410 = scalar_select %p409, %s23, 1
        %s411 = smul.addr %s408, 2
        %s412 = sadd.s32 %s410, %s411
        %s413 = smul.addr %s412, 8
        %s414 = scalar_lea.vmem %s7, %s413
        %p415 = scmp.lt.s32.totalorder %s22, 1
        %s416 = scalar_select %p415, %s22, 1
        %p417 = scmp.lt.s32.totalorder %s23, 1
        %s418 = scalar_select %p417, %s23, 1
        %s419 = smul.addr %s416, 2
        %s420 = sadd.s32 %s418, %s419
        %s421 = smul.addr %s420, 4
        %s422 = scalar_lea.vmem %s0, %s421
        %p423 = scmp.lt.s32.totalorder %s22, 1
        %s424 = scalar_select %p423, %s22, 1
        %p425 = scmp.lt.s32.totalorder %s23, 1
        %s426 = scalar_select %p425, %s23, 1
        %s427 = smul.addr %s426, 2
        %s428 = smul.addr %s424, 4
        %s429 = sadd.s32 %s427, %s428
        %s430 = smul.addr %s429, 4
        %s431 = scalar_lea.vmem %s2, %s430
        %p432 = scmp.lt.s32.totalorder %s22, 1
        %s433 = scalar_select %p432, %s22, 1
        %p434 = scmp.lt.s32.totalorder %s23, 1
        %s435 = scalar_select %p434, %s23, 1
        %s436 = smul.addr %s435, 2
        %s437 = smul.addr %s433, 4
        %s438 = sadd.s32 %s436, %s437
        %s439 = smul.addr %s438, 4
        %s440 = scalar_lea.vmem %s3, %s439
        %p441 = scmp.lt.s32.totalorder %s22, 1
        %s442 = scalar_select %p441, %s22, 1
        %p443 = scmp.lt.s32.totalorder %s23, 1
        %s444 = scalar_select %p443, %s23, 1
        %s445 = smul.addr %s442, 2
        %s446 = sadd.s32 %s444, %s445
        %s447 = smul.addr %s446, 8
        %s448 = scalar_lea.vmem %s7, %s447
        %v450 = vld [vmem:[%s431] sm:$0xf]
        %v451 = vld [vmem:[%s431 + $0x4] sm:$0xf]
        %v452 = vld [vmem:[%s357] sm:$0xf]
        %v453 = vld [vmem:[%s357 + $0x4] sm:$0xf]
        %v454 = vld [vmem:[%s440] sm:$0xf]
        %v455 = vld [vmem:[%s440 + $0x4] sm:$0xf]
        %v458 = vunpack.c.l.b16 %v450
        %v459 = vunpack.c.l.b16 %v451
        %v460 = vpack.c.b16 %v459, %v458
        %461 = vrot.lane.b32.xlu0 %v460, 16
        %v462 = vpop.permute.xlu0 %461
        %v465 = vunpack.c.l.b16 %v452
        %v466 = vunpack.c.l.b16 %v453
        %v467 = vpack.c.b16 %v466, %v465
        %468 = vrot.lane.b32.xlu0 %v467, 32
        %v469 = vpop.permute.xlu0 %468
        %v472 = vunpack.c.l.b16 %v454
        %v473 = vunpack.c.l.b16 %v455
        %v474 = vpack.c.b16 %v473, %v472
        %475 = vrot.lane.b32.xlu0 %v474, 32
        %v476 = vpop.permute.xlu0 %475
        %vm477 = vcmask 130048
        %v480 = vsel %vm477, 0, %v462
        %vm481 = vcmask 261120
        %v483 = vsel %vm481, %v480, %v469
        %v486 = vsel %vm481, %v469, %v476
        %vm487 = vcmask 392192
        %v488 = vsel %vm487, %v486, 0
        %v490 = vunpack.c.l.bf16 %v483
        %v491 = vunpack.c.l.bf16 %v488
        %v492 = vunpack.c.h.bf16 %v483
        %v493 = vunpack.c.h.bf16 %v488
        %v494 = vld [vmem:[%s4] sm:$0xff]
        %v495 = vld [vmem:[%s4 + $0x8] sm:$0xff]
        %497 = vset.pattern.permute.xlu0 0
        %498 = vperm.xlu0 %497, %v494
        %v499 = vpop.permute.xlu0 %498
        %502 = vset.pattern.permute.xlu0 0
        %503 = vperm.xlu0 %502, %v495
        %v504 = vpop.permute.xlu0 %503
        %v506 = vmul.f32 %v490, %v499
        %v507 = vmul.f32 %v491, %v499
        %v508 = vmul.f32 %v492, %v504
        %v509 = vmul.f32 %v493, %v504
        %v510 = vld [vmem:[%s5] sm:$0xff]
        %v511 = vld [vmem:[%s5 + $0x8] sm:$0xff]
        %513 = vset.pattern.permute.xlu0 0
        %514 = vperm.xlu0 %513, %v510
        %v515 = vpop.permute.xlu0 %514
        %518 = vset.pattern.permute.xlu0 0
        %519 = vperm.xlu0 %518, %v511
        %v520 = vpop.permute.xlu0 %519
        %v522 = vadd.f32 %v506, %v515
        %v523 = vadd.f32 %v507, %v515
        %v524 = vadd.f32 %v508, %v520
        %v525 = vadd.f32 %v509, %v520
        %v526 = vmax.f32 %v522, 0.0
        %v527 = vmax.f32 %v523, 0.0
        %v528 = vmax.f32 %v524, 0.0
        %v529 = vmax.f32 %v525, 0.0
        %v530 = vlaneseq
        %v531 = vand.u32 %v530, 127
        %v532 = vadd.s32 %v531, 128
        %p533 = scmp.gt.s32.totalorder %s23, 0
        %vm534 = vcmp.ge.s32.totalorder %v531, 32
        %vm535 = vcmp.ge.s32.totalorder %v532, 32
        %s536 = scalar_select %p533, 1, 0
        %v537 = vstv %s536
        %vm538 = vcmp.eq.s32.totalorder %v537, 1
        %vm539 = vmor %vm538, %vm534
        %vm540 = vmor %vm538, %vm535
        %p541 = scmp.lt.s32.totalorder %s23, 1
        %vm542 = vcmp.lt.s32.totalorder %v531, 160
        %vm543 = vcmp.lt.s32.totalorder %v532, 160
        %s544 = scalar_select %p541, 1, 0
        %v545 = vstv %s544
        %vm546 = vcmp.eq.s32.totalorder %v545, 1
        %vm547 = vmor %vm546, %vm542
        %vm548 = vmor %vm546, %vm543
        %vm549 = vmand %vm539, %vm547
        %vm550 = vmand %vm540, %vm548
        %v551 = vsel %vm549, 1, 0
        %v552 = vsel %vm550, 1, 0
        %v553 = vcvt.s32.f32 %v551
        %v554 = vcvt.s32.f32 %v552
        %v555 = vmul.f32 %v526, %v553
        %v556 = vmul.f32 %v527, %v554
        %v557 = vmul.f32 %v528, %v553
        %v558 = vmul.f32 %v529, %v554
        %vm559 = vcmp.lt.s32.totalorder %v531, 0
        %v560 = vsub.s32 0, %v531
        %v561 = vsel %vm559, %v560, %v531
        %v562 = vshrl.u32 %v561, 4
        %v563 = vand.u32 %v561, 15
        %v564 = vsub.s32 0, %v563
        %v565 = vsel %vm559, %v564, %v563
        %vm566 = vcmp.ne.s32.totalorder %v565, 0
        %vm567 = vcmp.lt.s32.totalorder %v565, 0
        %vm568 = vmand %vm567, %vm566
        %v569 = vadd.s32 %v565, 16
        %v570 = vsel %vm568, %v569, %v565
        %vm571 = vcmp.gt.s32.totalorder %v570, 0
        %v572 = vsel %vm571, 1, 0
        %v573 = vcvt.s32.f32 %v572
        %vm574 = vcmp.lt.s32.totalorder %v570, 15
        %v575 = vsel %vm574, 1, 0
        %v576 = vcvt.s32.f32 %v575
        %578 = vrot.lane.b32.xlu0 %v573, 15
        %v579 = vpop.permute.xlu0 %578
        %v581 = vmul.f32 %v555, %v579
        %v582 = vmul.f32 %v556, %v579
        %v583 = vmul.f32 %v557, %v579
        %v584 = vmul.f32 %v558, %v579
        %589 = vrot.lane.b32.xlu0 %v581, 113
        %v590 = vpop.permute.xlu0 %589
        %591 = vrot.lane.b32.xlu0 %v582, 113
        %v592 = vpop.permute.xlu0 %591
        %593 = vrot.lane.b32.xlu0 %v583, 113
        %v594 = vpop.permute.xlu0 %593
        %595 = vrot.lane.b32.xlu0 %v584, 113
        %v596 = vpop.permute.xlu0 %595
        %vm597 = vcmask 924672
        %v598 = vsel %vm597, %v590, %v592
        %v599 = vsel %vm597, %v594, %v596
        %602 = vst [vmem:[#allocation2] sm:$0xff] %v598
        %603 = vst [vmem:[#allocation2 + $0x8] sm:$0xff] %v599
        %608 = vrot.lane.b32.xlu0 %v555, 112
        %v609 = vpop.permute.xlu0 %608
        %610 = vrot.lane.b32.xlu0 %v556, 112
        %v611 = vpop.permute.xlu0 %610
        %612 = vrot.lane.b32.xlu0 %v557, 112
        %v613 = vpop.permute.xlu0 %612
        %614 = vrot.lane.b32.xlu0 %v558, 112
        %v615 = vpop.permute.xlu0 %614
        %vm616 = vcmask 916480
        %v617 = vsel %vm616, %v609, %v611
        %v618 = vsel %vm616, %v613, %v615
        %621 = vst [vmem:[#allocation2 + $0x10] sm:$0xff] %v617
        %622 = vst [vmem:[#allocation2 + $0x18] sm:$0xff] %v618
        %624 = vrot.lane.b32.xlu0 %v576, 17
        %v625 = vpop.permute.xlu0 %624
        %v627 = vmul.f32 %v555, %v625
        %v628 = vmul.f32 %v556, %v625
        %v629 = vmul.f32 %v557, %v625
        %v630 = vmul.f32 %v558, %v625
        %635 = vrot.lane.b32.xlu0 %v627, 111
        %v636 = vpop.permute.xlu0 %635
        %637 = vrot.lane.b32.xlu0 %v628, 111
        %v638 = vpop.permute.xlu0 %637
        %639 = vrot.lane.b32.xlu0 %v629, 111
        %v640 = vpop.permute.xlu0 %639
        %641 = vrot.lane.b32.xlu0 %v630, 111
        %v642 = vpop.permute.xlu0 %641
        %vm643 = vcmask 908288
        %v644 = vsel %vm643, %v636, %v638
        %v645 = vsel %vm643, %v640, %v642
        %648 = vst [vmem:[#allocation2 + $0x20] sm:$0xff] %v644
        %649 = vst [vmem:[#allocation2 + $0x28] sm:$0xff] %v645
        %650 = vrot.lane.b32.xlu0 %v573, 31
        %v651 = vpop.permute.xlu0 %650
        %v653 = vmul.f32 %v555, %v651
        %v654 = vmul.f32 %v556, %v651
        %v655 = vmul.f32 %v557, %v651
        %v656 = vmul.f32 %v558, %v651
        %661 = vrot.lane.b32.xlu0 %v653, 97
        %v662 = vpop.permute.xlu0 %661
        %663 = vrot.lane.b32.xlu0 %v654, 97
        %v664 = vpop.permute.xlu0 %663
        %665 = vrot.lane.b32.xlu0 %v655, 97
        %v666 = vpop.permute.xlu0 %665
        %667 = vrot.lane.b32.xlu0 %v656, 97
        %v668 = vpop.permute.xlu0 %667
        %vm669 = vcmask 793600
        %v670 = vsel %vm669, %v662, %v664
        %v671 = vsel %vm669, %v666, %v668
        %674 = vst [vmem:[#allocation2 + $0x30] sm:$0xff] %v670
        %675 = vst [vmem:[#allocation2 + $0x38] sm:$0xff] %v671
        %676 = vrot.lane.b32.xlu0 %v555, 96
        %v677 = vpop.permute.xlu0 %676
        %678 = vrot.lane.b32.xlu0 %v556, 96
        %v679 = vpop.permute.xlu0 %678
        %680 = vrot.lane.b32.xlu0 %v557, 96
        %v681 = vpop.permute.xlu0 %680
        %682 = vrot.lane.b32.xlu0 %v558, 96
        %v683 = vpop.permute.xlu0 %682
        %vm684 = vcmask 785408
        %v685 = vsel %vm684, %v677, %v679
        %v686 = vsel %vm684, %v681, %v683
        %689 = vst [vmem:[#allocation2 + $0x40] sm:$0xff] %v685
        %690 = vst [vmem:[#allocation2 + $0x48] sm:$0xff] %v686
        %691 = vrot.lane.b32.xlu0 %v576, 33
        %v692 = vpop.permute.xlu0 %691
        %v694 = vmul.f32 %v555, %v692
        %v695 = vmul.f32 %v556, %v692
        %v696 = vmul.f32 %v557, %v692
        %v697 = vmul.f32 %v558, %v692
        %702 = vrot.lane.b32.xlu0 %v694, 95
        %v703 = vpop.permute.xlu0 %702
        %704 = vrot.lane.b32.xlu0 %v695, 95
        %v705 = vpop.permute.xlu0 %704
        %706 = vrot.lane.b32.xlu0 %v696, 95
        %v707 = vpop.permute.xlu0 %706
        %708 = vrot.lane.b32.xlu0 %v697, 95
        %v709 = vpop.permute.xlu0 %708
        %vm710 = vcmask 777216
        %v711 = vsel %vm710, %v703, %v705
        %v712 = vsel %vm710, %v707, %v709
        %715 = vst [vmem:[#allocation2 + $0x50] sm:$0xff] %v711
        %716 = vst [vmem:[#allocation2 + $0x58] sm:$0xff] %v712
        %717 = vrot.lane.b32.xlu0 %v573, 47
        %v718 = vpop.permute.xlu0 %717
        %v720 = vmul.f32 %v555, %v718
        %v721 = vmul.f32 %v556, %v718
        %v722 = vmul.f32 %v557, %v718
        %v723 = vmul.f32 %v558, %v718
        %728 = vrot.lane.b32.xlu0 %v720, 81
        %v729 = vpop.permute.xlu0 %728
        %730 = vrot.lane.b32.xlu0 %v721, 81
        %v731 = vpop.permute.xlu0 %730
        %732 = vrot.lane.b32.xlu0 %v722, 81
        %v733 = vpop.permute.xlu0 %732
        %734 = vrot.lane.b32.xlu0 %v723, 81
        %v735 = vpop.permute.xlu0 %734
        %vm736 = vcmask 662528
        %v737 = vsel %vm736, %v729, %v731
        %v738 = vsel %vm736, %v733, %v735
        %741 = vst [vmem:[#allocation2 + $0x60] sm:$0xff] %v737
        %742 = vst [vmem:[#allocation2 + $0x68] sm:$0xff] %v738
        %743 = vrot.lane.b32.xlu0 %v555, 80
        %v744 = vpop.permute.xlu0 %743
        %745 = vrot.lane.b32.xlu0 %v556, 80
        %v746 = vpop.permute.xlu0 %745
        %747 = vrot.lane.b32.xlu0 %v557, 80
        %v748 = vpop.permute.xlu0 %747
        %749 = vrot.lane.b32.xlu0 %v558, 80
        %v750 = vpop.permute.xlu0 %749
        %vm751 = vcmask 654336
        %v752 = vsel %vm751, %v744, %v746
        %v753 = vsel %vm751, %v748, %v750
        %756 = vst [vmem:[#allocation2 + $0x70] sm:$0xff] %v752
        %757 = vst [vmem:[#allocation2 + $0x78] sm:$0xff] %v753
        %758 = vrot.lane.b32.xlu0 %v576, 49
        %v759 = vpop.permute.xlu0 %758
        %v761 = vmul.f32 %v555, %v759
        %v762 = vmul.f32 %v556, %v759
        %v763 = vmul.f32 %v557, %v759
        %v764 = vmul.f32 %v558, %v759
        %769 = vrot.lane.b32.xlu0 %v761, 79
        %v770 = vpop.permute.xlu0 %769
        %771 = vrot.lane.b32.xlu0 %v762, 79
        %v772 = vpop.permute.xlu0 %771
        %773 = vrot.lane.b32.xlu0 %v763, 79
        %v774 = vpop.permute.xlu0 %773
        %775 = vrot.lane.b32.xlu0 %v764, 79
        %v776 = vpop.permute.xlu0 %775
        %vm777 = vcmask 646144
        %v778 = vsel %vm777, %v770, %v772
        %v779 = vsel %vm777, %v774, %v776
        %782 = vst [vmem:[#allocation2 + $0x80] sm:$0xff] %v778
        %783 = vst [vmem:[#allocation2 + $0x88] sm:$0xff] %v779
        %v784 = vld [vmem:[%s6] sm:$0xff]
        %v785 = vld [vmem:[#allocation2] sm:$0xff]
        %v786 = vld [vmem:[#allocation2 + $0x8] sm:$0xff]
        %v787 = vld [vmem:[#allocation2 + $0x10] sm:$0xff]
        %v788 = vld [vmem:[#allocation2 + $0x18] sm:$0xff]
        %v789 = vld [vmem:[#allocation2 + $0x20] sm:$0xff]
        %v790 = vld [vmem:[#allocation2 + $0x28] sm:$0xff]
        %v791 = vld [vmem:[#allocation2 + $0x30] sm:$0xff]
        %v792 = vld [vmem:[#allocation2 + $0x38] sm:$0xff]
        %v793 = vld [vmem:[#allocation2 + $0x40] sm:$0xff]
        %v794 = vld [vmem:[#allocation2 + $0x48] sm:$0xff]
        %v795 = vld [vmem:[#allocation2 + $0x50] sm:$0xff]
        %v796 = vld [vmem:[#allocation2 + $0x58] sm:$0xff]
        %v797 = vld [vmem:[#allocation2 + $0x60] sm:$0xff]
        %v798 = vld [vmem:[#allocation2 + $0x68] sm:$0xff]
        %v799 = vld [vmem:[#allocation2 + $0x70] sm:$0xff]
        %v800 = vld [vmem:[#allocation2 + $0x78] sm:$0xff]
        %v801 = vld [vmem:[#allocation2 + $0x80] sm:$0xff]
        %v802 = vld [vmem:[#allocation2 + $0x88] sm:$0xff]
        %804 = vst [vmem:[#allocation1] ss:$2 sm:$0xff] %v784
        %v805 = vld.sshfl [vmem:[#allocation1] sm:$0xff pattern:$0x75316420]
        %v806 = vld.sshfl [vmem:[#allocation1 + $0x8] sm:$0xff pattern:$0x75316420]
        %v808 = vsel %vm477, %v806, 0
        %810 = vmatpush.msra.mxu0 %v800
        %811 = vmatpush.msra.mxu0 %v799
        %812 = vmatpush.msra.mxu0 %v798
        %813 = vmatpush.msra.mxu0 %v797
        %814 = vmatpush.msra.mxu0 %v796
        %815 = vmatpush.msra.mxu0 %v795
        %816 = vmatpush.msra.mxu0 %v794
        %817 = vmatpush.msra.mxu0 %v793
        %818 = vmatpush.msra.mxu0 %v792
        %819 = vmatpush.msra.mxu0 %v791
        %820 = vmatpush.msra.mxu0 %v790
        %821 = vmatpush.msra.mxu0 %v789
        %822 = vmatpush.msra.mxu0 %v788
        %823 = vmatpush.msra.mxu0 %v787
        %824 = vmatpush.msra.mxu0 %v786
        %825 = vmatpush.msra.mxu0 %v785
        %826 = vmatmul.f32.gmra.mxu0 %v805
        %v827 = vpop.f32.mrf.mxu0
        %v828 = vadd.f32 0.0, %v827
        %829 = vdwg.mxu0
        %830 = vmatpush.msra.mxu0 0.0
        %831 = vmatpush.msra.mxu0 0.0
        %832 = vmatpush.msra.mxu0 0.0
        %833 = vmatpush.msra.mxu0 0.0
        %834 = vmatpush.msra.mxu0 0.0
        %835 = vmatpush.msra.mxu0 0.0
        %836 = vmatpush.msra.mxu0 0.0
        %837 = vmatpush.msra.mxu0 0.0
        %838 = vmatpush.msra.mxu0 0.0
        %839 = vmatpush.msra.mxu0 0.0
        %840 = vmatpush.msra.mxu0 0.0
        %841 = vmatpush.msra.mxu0 0.0
        %842 = vmatpush.msra.mxu0 0.0
        %843 = vmatpush.msra.mxu0 0.0
        %844 = vmatpush.msra.mxu0 %v802
        %845 = vmatpush.msra.mxu0 %v801
        %846 = vmatmul.f32.gmra.mxu0 %v808
        %v847 = vpop.f32.mrf.mxu0
        %v848 = vadd.f32 %v828, %v847
        %849 = vdwg.mxu0
        %v850 = vld [vmem:[%s422] sm:$0xf]
        %v852 = vrot.slane %v848, 4
        %vm854 = vcmask 1043456
        %v855 = vsel %vm854, %v850, %v852
        %856 = vst [vmem:[%s448] sm:$0xff] %v855
        %p857 = scmp.lt.s32.totalorder %s22, 1
        %s858 = scalar_select %p857, %s22, 1
        %p859 = scmp.lt.s32.totalorder %s23, 1
        %s860 = scalar_select %p859, %s23, 1
        %s861 = smul.addr %s858, 2
        %s862 = sadd.s32 %s860, %s861
        %s863 = smul.addr %s862, 8
        %s864 = scalar_lea.vmem %s7, %s863
        // Predicated region
        $region90: #{bottleneck_block_forward.3} parent=84 // pred_check
          %p865 = pneg %p225
        $region91: #{bottleneck_block_forward.3} parent=84 // pred_check_branch
          %867 = sbr.rel (%p865) target = $region93
        $region92: #{bottleneck_block_forward.3} parent=84 // pred_region
          _
        $region93: #{bottleneck_block_forward.3} parent=84 // pred_fallthru
          _
      $region85: #{bottleneck_block_forward.3} parent=5 // pred_fallthru
        _
      %p868 = scmp.le.s32.totalorder 2, %s13
      // Predicated region
      $region94: #{bottleneck_block_forward.3} parent=5 // pred_check
        %p869 = pneg %p868
      $region95: #{bottleneck_block_forward.3} parent=5 // pred_check_branch
        %871 = sbr.rel (%p869) target = $region97
      $region96: #{bottleneck_block_forward.3} parent=5 // pred_region
        %s872 = ssub.s32 %s13, 2
        // Predicated region
        $region98: #{bottleneck_block_forward.3} parent=96 // pred_check
          %p873 = pneg %p231
        $region99: #{bottleneck_block_forward.3} parent=96 // pred_check_branch
          %875 = sbr.rel (%p873) target = $region101
        $region100: #{bottleneck_block_forward.3} parent=96 // pred_region
          %p876 = scmp.lt.s32.totalorder %s24, 1
          %s877 = scalar_select %p876, %s24, 1
          %p878 = scmp.lt.s32.totalorder %s25, 1
          %s879 = scalar_select %p878, %s25, 1
          %s880 = smul.addr %s877, 2
          %s881 = sadd.s32 %s879, %s880
          %s882 = smul.addr %s881, 8
          %s883 = scalar_lea.vmem %s7, %s882
        $region101: #{bottleneck_block_forward.3} parent=96 // pred_fallthru
          _
      $region97: #{bottleneck_block_forward.3} parent=5 // pred_fallthru
        _
    $region6: #{bottleneck_block_forward.3} parent=1 // loop_footer
      %s17 = sadd.s32 1, %s13
    $region7: #{bottleneck_block_forward.3} parent=1 // loop_footer_branch
      %12 = sbr.rel target = $region3
    $region8: #{bottleneck_block_forward.3} parent=1 // loop_exit
      _

</llo_original>
